<compile_context>
chip_gen: v7x
topology: tpu7x:2x2x1
jax: 0.10.0
libtpu: 0.0.40
codegen_flags: <defaults>
</compile_context>

<pallas_src>
import jax
import jax.numpy as jnp
from jax import lax
from jax.experimental import pallas as pl
from jax.experimental.pallas import tpu as pltpu

EPS = 1e-5
LEAKY_SLOPE = 0.01
LANE = 128


def _round_up(x: int, m: int) -> int:
    return ((x + m - 1) // m) * m


def _pad2d(x, rows: int, cols: int):
    r, c = x.shape
    if r == rows and c == cols:
        return x
    return jnp.pad(x, ((0, rows - r), (0, cols - c)))


# --------------------------------------------------------------------------- #
# Fused whole-VAE kernel (built as a closure over the static layer structure)
# --------------------------------------------------------------------------- #
def _make_vae_kernel(n_enc, n_dec, enc_units, dec_units, latent_pad,
                     b_real, b_pad, use_batchnorm, dropout_rate):

    def dense(h, w_ref, b_ref, leaky):
        y = jnp.dot(h, w_ref[...], preferred_element_type=jnp.float32) + b_ref[...]
        if leaky:
            y = jnp.where(y >= 0.0, y, LEAKY_SLOPE * y)
        return y

    def cond_norm(h, g_ref, be_ref, u_real):
        g = g_ref[...]
        be = be_ref[...]
        if use_batchnorm:
            # BatchNorm1d training mode: biased variance over the batch axis.
            inv_n = 1.0 / b_real
            hs = h
            if b_pad > b_real:
                row_mask = lax.broadcasted_iota(jnp.int32, h.shape, 0) < b_real
                hs = jnp.where(row_mask, h, 0.0)
            mean = jnp.sum(hs, axis=0, keepdims=True) * inv_n
            hc = hs - mean
            if b_pad > b_real:
                hc = jnp.where(row_mask, hc, 0.0)
            var = jnp.sum(hc * hc, axis=0, keepdims=True) * inv_n
        else:
            # LayerNorm over the (real) feature axis; padded lanes are masked out.
            inv_n = 1.0 / u_real
            mean = jnp.sum(h, axis=-1, keepdims=True) * inv_n
            hc = h - mean
            if h.shape[-1] > u_real:
                col_mask = lax.broadcasted_iota(jnp.int32, h.shape, 1) < u_real
                hc = jnp.where(col_mask, hc, 0.0)
            var = jnp.sum(hc * hc, axis=-1, keepdims=True) * inv_n
        inv = lax.rsqrt(var + EPS)                       # EUP slot
        # Padded lanes: gamma=beta=0 -> output 0, so downstream K-padding stays exact.
        return (h - mean) * inv * g + be

    def dropout(h):
        if dropout_rate <= 0.0:                          # identity (example config)
            return h
        # In-kernel dropout mask via the TPU PRNG (no HBM mask round-trip).
        # TODO(synk): RNG stream differs from torch.nn.Dropout / jax.random.bernoulli.
        bits = pltpu.bitcast(pltpu.prng_random_bits(h.shape), jnp.uint32)
        thresh = jnp.uint32(min(int(dropout_rate * float(2 ** 32)), 2 ** 32 - 1))
        keep = bits >= thresh
        return jnp.where(keep, h * (1.0 / (1.0 - dropout_rate)), 0.0)

    def kernel(*refs):
        it = iter(refs)
        if dropout_rate > 0.0:
            seed_ref = next(it)
        x_ref = next(it)
        eps_ref = next(it)
        enc = [tuple(next(it) for _ in range(4)) for _ in range(n_enc)]
        heads_w_ref = next(it)
        heads_b_ref = next(it)
        dec = [tuple(next(it) for _ in range(4)) for _ in range(n_dec)]
        out_w_ref = next(it)
        out_b_ref = next(it)
        x_recon_ref = next(it)
        z_mean_ref = next(it)
        z_lv_ref = next(it)

        if dropout_rate > 0.0:
            pltpu.prng_seed(seed_ref[0])

        # ---------------- Encoder ----------------
        h = x_ref[...].astype(jnp.float32)
        for (w_ref, b_ref, g_ref, be_ref), u_real in zip(enc, enc_units):
            h = dense(h, w_ref, b_ref, leaky=True)       # Linear + LeakyReLU
            h = cond_norm(h, g_ref, be_ref, u_real)      # ConditionalNorm
            h = dropout(h)                               # Dropout

        # ------- Heads (z_mean | z_log_var fused into one matmul) + reparam -------
        heads = dense(h, heads_w_ref, heads_b_ref, leaky=False)
        z_mean = heads[:, :latent_pad]
        z_log_var = jnp.clip(heads[:, latent_pad:2 * latent_pad], -10.0, 10.0)
        std = jnp.exp(0.5 * z_log_var)
        z = z_mean + eps_ref[...].astype(jnp.float32) * std

        # ---------------- Decoder ----------------
        h = z
        for (w_ref, b_ref, g_ref, be_ref), u_real in zip(dec, dec_units):
            h = dense(h, w_ref, b_ref, leaky=True)
            h = cond_norm(h, g_ref, be_ref, u_real)
            h = dropout(h)

        x_recon = dense(h, out_w_ref, out_b_ref, leaky=False)

        x_recon_ref[...] = x_recon.astype(x_recon_ref.dtype)
        z_mean_ref[...] = z_mean.astype(z_mean_ref.dtype)
        z_lv_ref[...] = z_log_var.astype(z_lv_ref.dtype)

    return kernel


# --------------------------------------------------------------------------- #
# Parameter preparation: pad/cast ONCE, outside the forward path
# --------------------------------------------------------------------------- #
def prepare_params(params):
    def pad_w(w):
        k, n = w.shape
        return _pad2d(w.astype(jnp.float32), _round_up(k, LANE), _round_up(n, LANE))

    def pad_row(v):
        n = v.shape[0]
        return _pad2d(v.reshape(1, n).astype(jnp.float32), 1, _round_up(n, LANE))

    enc = [(pad_w(w), pad_row(b), pad_row(g), pad_row(be))
           for (w, b, g, be) in params["enc"]]
    dec = [(pad_w(w), pad_row(b), pad_row(g), pad_row(be))
           for (w, b, g, be) in params["dec"]]

    wm, bm = params["z_mean"]
    wl, bl = params["z_log_var"]
    heads_w = jnp.concatenate([pad_w(wm), pad_w(wl)], axis=1)   # [W_mean | W_logvar]
    heads_b = jnp.concatenate([pad_row(bm), pad_row(bl)], axis=1)

    wo, bo = params["out"]
    meta = dict(
        input_dim=wo.shape[1],
        latent_dim=wm.shape[1],
        enc_units=[w.shape[1] for (w, _, _, _) in params["enc"]],
        dec_units=[w.shape[1] for (w, _, _, _) in params["dec"]],
        latent_pad=_round_up(wm.shape[1], LANE),
        input_pad=_round_up(params["enc"][0][0].shape[0], LANE),
        out_pad=_round_up(wo.shape[1], LANE),
    )
    return dict(enc=enc, dec=dec, heads_w=heads_w, heads_b=heads_b,
                out_w=pad_w(wo), out_b=pad_row(bo), meta=meta)


# --------------------------------------------------------------------------- #
# Fused forward wrapper (one pallas_call for the whole network)
# --------------------------------------------------------------------------- #
def vae_forward_fused(prepared, x, eps, *, use_batchnorm,
                      dropout_rate=0.0, dropout_seed=0):
    meta = prepared["meta"]
    b_real, _ = x.shape
    b_pad = _round_up(b_real, 8)
    d_pad = meta["input_pad"]
    l_pad = meta["latent_pad"]
    l_real = meta["latent_dim"]
    out_pad = meta["out_pad"]

    xp = _pad2d(x.astype(jnp.float32), b_pad, d_pad)
    epsp = _pad2d(eps.astype(jnp.float32), b_pad, l_pad)

    vmem = pl.BlockSpec(memory_space=pltpu.MemorySpace.VMEM)
    inputs, in_specs = [], []
    if dropout_rate > 0.0:
        inputs.append(jnp.asarray([dropout_seed], jnp.int32))
        in_specs.append(pl.BlockSpec(memory_space=pltpu.MemorySpace.SMEM))
    inputs += [xp, epsp]
    in_specs += [vmem, vmem]
    for layer in prepared["enc"]:
        inputs += list(layer)
        in_specs += [vmem] * 4
    inputs += [prepared["heads_w"], prepared["heads_b"]]
    in_specs += [vmem, vmem]
    for layer in prepared["dec"]:
        inputs += list(layer)
        in_specs += [vmem] * 4
    inputs += [prepared["out_w"], prepared["out_b"]]
    in_specs += [vmem, vmem]

    kernel = _make_vae_kernel(
        n_enc=len(prepared["enc"]), n_dec=len(prepared["dec"]),
        enc_units=meta["enc_units"], dec_units=meta["dec_units"],
        latent_pad=l_pad, b_real=b_real, b_pad=b_pad,
        use_batchnorm=use_batchnorm, dropout_rate=dropout_rate)

    all_ws = ([l[0] for l in prepared["enc"]] + [prepared["heads_w"]]
              + [l[0] for l in prepared["dec"]] + [prepared["out_w"]])
    flops = sum(2 * b_pad * w.shape[0] * w.shape[1] for w in all_ws)
    bytes_accessed = (sum(int(a.size) * a.dtype.itemsize for a in inputs)
                      + 4 * (b_pad * out_pad + 2 * b_pad * l_pad))

    out_shapes = (
        jax.ShapeDtypeStruct((b_pad, out_pad), x.dtype),
        jax.ShapeDtypeStruct((b_pad, l_pad), x.dtype),
        jax.ShapeDtypeStruct((b_pad, l_pad), x.dtype),
    )
    x_recon, z_mean, z_log_var = pl.pallas_call(
        kernel,
        out_shape=out_shapes,
        in_specs=in_specs,
        out_specs=(vmem, vmem, vmem),
        cost_estimate=pl.CostEstimate(
            flops=int(flops),
            transcendentals=int(b_pad * l_pad),
            bytes_accessed=int(bytes_accessed)),
    )(*inputs)

    return (x_recon[:b_real, :meta["input_dim"]],
            z_mean[:b_real, :l_real],
            z_log_var[:b_real, :l_real])


# --------------------------------------------------------------------------- #
# Pure-jnp reference (for correctness checking)
# --------------------------------------------------------------------------- #
def _ref_linear(x, w, b, apply_leaky):
    y = jnp.dot(x, w, precision=lax.Precision.HIGHEST) + b
    if apply_leaky:
        y = jnp.where(y >= 0, y, LEAKY_SLOPE * y)
    return y


def _ref_norm(x, gamma, beta, use_batchnorm):
    axis = 0 if use_batchnorm else -1
    mean = x.mean(axis=axis, keepdims=True)
    var = ((x - mean) ** 2).mean(axis=axis, keepdims=True)
    return (x - mean) * lax.rsqrt(var + EPS) * gamma + beta


def vae_forward_ref(params, x, eps, use_batchnorm):
    h = x
    for (w, b, g, be) in params["enc"]:
        h = _ref_norm(_ref_linear(h, w, b, True), g, be, use_batchnorm)
    z_mean = _ref_linear(h, *params["z_mean"], apply_leaky=False)
    z_log_var = jnp.clip(_ref_linear(h, *params["z_log_var"], apply_leaky=False),
                         -10.0, 10.0)
    z = z_mean + eps * jnp.exp(0.5 * z_log_var)
    h = z
    for (w, b, g, be) in params["dec"]:
        h = _ref_norm(_ref_linear(h, w, b, True), g, be, use_batchnorm)
    x_recon = _ref_linear(h, *params["out"], apply_leaky=False)
    return x_recon, z_mean, z_log_var


# --------------------------------------------------------------------------- #
# Parameter init (weights stored as (in, out); same linear map as PyTorch's x@W.T)
# --------------------------------------------------------------------------- #
def init_params(key, input_dim, latent_dim, encoder_layers, decoder_layers):
    keys = iter(jax.random.split(key, 32))

    def lin(din, dout):
        w = jax.random.normal(next(keys), (din, dout), jnp.float32) / jnp.sqrt(float(din))
        b = jax.random.normal(next(keys), (dout,), jnp.float32) * 0.01
        return w, b

    def norm_affine(units):
        # PyTorch default affine init: gamma = ones, beta = zeros.
        return jnp.ones((units,), jnp.float32), jnp.zeros((units,), jnp.float32)

    enc, prev = [], input_dim
    for units in encoder_layers:
        w, b = lin(prev, units)
        g, be = norm_affine(units)
        enc.append((w, b, g, be))
        prev = units
    z_mean_p = lin(prev, latent_dim)
    z_log_var_p = lin(prev, latent_dim)

    dec, prev = [], latent_dim
    for units in decoder_layers:
        w, b = lin(prev, units)
        g, be = norm_affine(units)
        dec.append((w, b, g, be))
        prev = units
    out_p = lin(prev, input_dim)

    return dict(enc=enc, z_mean=z_mean_p, z_log_var=z_log_var_p, dec=dec, out=out_p)


if __name__ == "__main__":
    key = jax.random.PRNGKey(0)
    batch, input_dim, latent_dim = 8, 32, 8
    encoder_layers = [64, 32]
    decoder_layers = [32, 64]
    dropout_rate = 0.0   # nn.Dropout is identity at rate 0 (deterministic check)

    k_x, k_eps, k_p = jax.random.split(key, 3)
    params = init_params(k_p, input_dim, latent_dim, encoder_layers, decoder_layers)
    prepared = prepare_params(params)   # pad / cast once, outside the forward path
    x = jax.random.normal(k_x, (batch, input_dim), dtype=jnp.float32)
    eps = jax.random.normal(k_eps, (batch, latent_dim), dtype=jnp.float32)

    for use_bn in (True, False):
        got = vae_forward_fused(prepared, x, eps, use_batchnorm=use_bn,
                                dropout_rate=dropout_rate)
        got = jax.block_until_ready(got)
        want = vae_forward_ref(params, x, eps, use_bn)
        for g, w, name in zip(got, want, ("x_recon", "z_mean", "z_log_var")):
            assert jnp.allclose(g, w, atol=2e-3, rtol=2e-3), \
                f"{name} mismatch (use_batchnorm={use_bn})"

    print("KERNEL_OK")
</pallas_src>

<mosaic_0001>
module attributes {stable_mosaic.version = 11 : i64} {
  func.func @kernel(%arg0: memref<8x128xf32, #tpu.memory_space<vmem>>, %arg1: memref<8x128xf32, #tpu.memory_space<vmem>>, %arg2: memref<128x128xf32, #tpu.memory_space<vmem>>, %arg3: memref<1x128xf32, #tpu.memory_space<vmem>>, %arg4: memref<1x128xf32, #tpu.memory_space<vmem>>, %arg5: memref<1x128xf32, #tpu.memory_space<vmem>>, %arg6: memref<128x128xf32, #tpu.memory_space<vmem>>, %arg7: memref<1x128xf32, #tpu.memory_space<vmem>>, %arg8: memref<1x128xf32, #tpu.memory_space<vmem>>, %arg9: memref<1x128xf32, #tpu.memory_space<vmem>>, %arg10: memref<128x256xf32, #tpu.memory_space<vmem>>, %arg11: memref<1x256xf32, #tpu.memory_space<vmem>>, %arg12: memref<128x128xf32, #tpu.memory_space<vmem>>, %arg13: memref<1x128xf32, #tpu.memory_space<vmem>>, %arg14: memref<1x128xf32, #tpu.memory_space<vmem>>, %arg15: memref<1x128xf32, #tpu.memory_space<vmem>>, %arg16: memref<128x128xf32, #tpu.memory_space<vmem>>, %arg17: memref<1x128xf32, #tpu.memory_space<vmem>>, %arg18: memref<1x128xf32, #tpu.memory_space<vmem>>, %arg19: memref<1x128xf32, #tpu.memory_space<vmem>>, %arg20: memref<128x128xf32, #tpu.memory_space<vmem>>, %arg21: memref<1x128xf32, #tpu.memory_space<vmem>>, %arg22: memref<8x128xf32, #tpu.memory_space<vmem>>, %arg23: memref<8x128xf32, #tpu.memory_space<vmem>>, %arg24: memref<8x128xf32, #tpu.memory_space<vmem>>) attributes {dimension_semantics = [], scalar_prefetch = 0 : i64, scratch_operands = 0 : i64, tpu.core_type = #tpu.core_type<tc>} {
    %c0 = arith.constant 0 : index
    %c0_0 = arith.constant 0 : index
    %0 = vector.load %arg0[%c0, %c0_0] : memref<8x128xf32, #tpu.memory_space<vmem>>, vector<8x128xf32>
    %c0_1 = arith.constant 0 : index
    %c0_2 = arith.constant 0 : index
    %1 = vector.load %arg2[%c0_1, %c0_2] : memref<128x128xf32, #tpu.memory_space<vmem>>, vector<128x128xf32>
    %cst = arith.constant dense<0.000000e+00> : vector<8x128xf32>
    %2 = tpu.matmul %0, %1, %cst {dimension_numbers = #tpu.dot_dimension_numbers<[1], [0], [0], [1], [0, 0, 1, 1], [], []>} : vector<8x128xf32>, vector<128x128xf32>, vector<8x128xf32> -> vector<8x128xf32>
    %c0_3 = arith.constant 0 : index
    %c0_4 = arith.constant 0 : index
    %3 = vector.load %arg3[%c0_3, %c0_4] : memref<1x128xf32, #tpu.memory_space<vmem>>, vector<1x128xf32>
    %4 = vector.broadcast %3 : vector<1x128xf32> to vector<8x128xf32>
    %5 = arith.addf %2, %4 : vector<8x128xf32>
    %cst_5 = arith.constant 0.000000e+00 : f32
    %6 = vector.broadcast %cst_5 : f32 to vector<8x128xf32>
    %7 = arith.cmpf oge, %5, %6 : vector<8x128xf32>
    %cst_6 = arith.constant 0.00999999977 : f32
    %8 = vector.broadcast %cst_6 : f32 to vector<8x128xf32>
    %9 = arith.mulf %8, %5 : vector<8x128xf32>
    %10 = arith.select %7, %5, %9 : vector<8x128xi1>, vector<8x128xf32>
    %c0_7 = arith.constant 0 : index
    %c0_8 = arith.constant 0 : index
    %11 = vector.load %arg4[%c0_7, %c0_8] : memref<1x128xf32, #tpu.memory_space<vmem>>, vector<1x128xf32>
    %c0_9 = arith.constant 0 : index
    %c0_10 = arith.constant 0 : index
    %12 = vector.load %arg5[%c0_9, %c0_10] : memref<1x128xf32, #tpu.memory_space<vmem>>, vector<1x128xf32>
    %cst_11 = arith.constant dense<0.000000e+00> : vector<128xf32>
    %13 = vector.multi_reduction <add>, %10, %cst_11 [0] : vector<8x128xf32> to vector<128xf32>
    %14 = vector.shape_cast %13 : vector<128xf32> to vector<1x128xf32>
    %cst_12 = arith.constant 1.250000e-01 : f32
    %15 = vector.broadcast %cst_12 : f32 to vector<1x128xf32>
    %16 = arith.mulf %14, %15 : vector<1x128xf32>
    %17 = vector.broadcast %16 : vector<1x128xf32> to vector<8x128xf32>
    %18 = arith.subf %10, %17 : vector<8x128xf32>
    %19 = arith.mulf %18, %18 : vector<8x128xf32>
    %cst_13 = arith.constant dense<0.000000e+00> : vector<128xf32>
    %20 = vector.multi_reduction <add>, %19, %cst_13 [0] : vector<8x128xf32> to vector<128xf32>
    %21 = vector.shape_cast %20 : vector<128xf32> to vector<1x128xf32>
    %cst_14 = arith.constant 1.250000e-01 : f32
    %22 = vector.broadcast %cst_14 : f32 to vector<1x128xf32>
    %23 = arith.mulf %21, %22 : vector<1x128xf32>
    %cst_15 = arith.constant 9.99999974E-6 : f32
    %24 = vector.broadcast %cst_15 : f32 to vector<1x128xf32>
    %25 = arith.addf %23, %24 : vector<1x128xf32>
    %26 = math.rsqrt %25 : vector<1x128xf32>
    %27 = vector.broadcast %16 : vector<1x128xf32> to vector<8x128xf32>
    %28 = arith.subf %10, %27 : vector<8x128xf32>
    %29 = vector.broadcast %26 : vector<1x128xf32> to vector<8x128xf32>
    %30 = arith.mulf %28, %29 : vector<8x128xf32>
    %31 = vector.broadcast %11 : vector<1x128xf32> to vector<8x128xf32>
    %32 = arith.mulf %30, %31 : vector<8x128xf32>
    %33 = vector.broadcast %12 : vector<1x128xf32> to vector<8x128xf32>
    %34 = arith.addf %32, %33 : vector<8x128xf32>
    %c0_16 = arith.constant 0 : index
    %c0_17 = arith.constant 0 : index
    %35 = vector.load %arg6[%c0_16, %c0_17] : memref<128x128xf32, #tpu.memory_space<vmem>>, vector<128x128xf32>
    %cst_18 = arith.constant dense<0.000000e+00> : vector<8x128xf32>
    %36 = tpu.matmul %34, %35, %cst_18 {dimension_numbers = #tpu.dot_dimension_numbers<[1], [0], [0], [1], [0, 0, 1, 1], [], []>} : vector<8x128xf32>, vector<128x128xf32>, vector<8x128xf32> -> vector<8x128xf32>
    %c0_19 = arith.constant 0 : index
    %c0_20 = arith.constant 0 : index
    %37 = vector.load %arg7[%c0_19, %c0_20] : memref<1x128xf32, #tpu.memory_space<vmem>>, vector<1x128xf32>
    %38 = vector.broadcast %37 : vector<1x128xf32> to vector<8x128xf32>
    %39 = arith.addf %36, %38 : vector<8x128xf32>
    %cst_21 = arith.constant 0.000000e+00 : f32
    %40 = vector.broadcast %cst_21 : f32 to vector<8x128xf32>
    %41 = arith.cmpf oge, %39, %40 : vector<8x128xf32>
    %cst_22 = arith.constant 0.00999999977 : f32
    %42 = vector.broadcast %cst_22 : f32 to vector<8x128xf32>
    %43 = arith.mulf %42, %39 : vector<8x128xf32>
    %44 = arith.select %41, %39, %43 : vector<8x128xi1>, vector<8x128xf32>
    %c0_23 = arith.constant 0 : index
    %c0_24 = arith.constant 0 : index
    %45 = vector.load %arg8[%c0_23, %c0_24] : memref<1x128xf32, #tpu.memory_space<vmem>>, vector<1x128xf32>
    %c0_25 = arith.constant 0 : index
    %c0_26 = arith.constant 0 : index
    %46 = vector.load %arg9[%c0_25, %c0_26] : memref<1x128xf32, #tpu.memory_space<vmem>>, vector<1x128xf32>
    %cst_27 = arith.constant dense<0.000000e+00> : vector<128xf32>
    %47 = vector.multi_reduction <add>, %44, %cst_27 [0] : vector<8x128xf32> to vector<128xf32>
    %48 = vector.shape_cast %47 : vector<128xf32> to vector<1x128xf32>
    %cst_28 = arith.constant 1.250000e-01 : f32
    %49 = vector.broadcast %cst_28 : f32 to vector<1x128xf32>
    %50 = arith.mulf %48, %49 : vector<1x128xf32>
    %51 = vector.broadcast %50 : vector<1x128xf32> to vector<8x128xf32>
    %52 = arith.subf %44, %51 : vector<8x128xf32>
    %53 = arith.mulf %52, %52 : vector<8x128xf32>
    %cst_29 = arith.constant dense<0.000000e+00> : vector<128xf32>
    %54 = vector.multi_reduction <add>, %53, %cst_29 [0] : vector<8x128xf32> to vector<128xf32>
    %55 = vector.shape_cast %54 : vector<128xf32> to vector<1x128xf32>
    %cst_30 = arith.constant 1.250000e-01 : f32
    %56 = vector.broadcast %cst_30 : f32 to vector<1x128xf32>
    %57 = arith.mulf %55, %56 : vector<1x128xf32>
    %cst_31 = arith.constant 9.99999974E-6 : f32
    %58 = vector.broadcast %cst_31 : f32 to vector<1x128xf32>
    %59 = arith.addf %57, %58 : vector<1x128xf32>
    %60 = math.rsqrt %59 : vector<1x128xf32>
    %61 = vector.broadcast %50 : vector<1x128xf32> to vector<8x128xf32>
    %62 = arith.subf %44, %61 : vector<8x128xf32>
    %63 = vector.broadcast %60 : vector<1x128xf32> to vector<8x128xf32>
    %64 = arith.mulf %62, %63 : vector<8x128xf32>
    %65 = vector.broadcast %45 : vector<1x128xf32> to vector<8x128xf32>
    %66 = arith.mulf %64, %65 : vector<8x128xf32>
    %67 = vector.broadcast %46 : vector<1x128xf32> to vector<8x128xf32>
    %68 = arith.addf %66, %67 : vector<8x128xf32>
    %c0_32 = arith.constant 0 : index
    %c0_33 = arith.constant 0 : index
    %69 = vector.load %arg10[%c0_32, %c0_33] : memref<128x256xf32, #tpu.memory_space<vmem>>, vector<128x256xf32>
    %cst_34 = arith.constant dense<0.000000e+00> : vector<8x256xf32>
    %70 = tpu.matmul %68, %69, %cst_34 {dimension_numbers = #tpu.dot_dimension_numbers<[1], [0], [0], [1], [0, 0, 1, 1], [], []>} : vector<8x128xf32>, vector<128x256xf32>, vector<8x256xf32> -> vector<8x256xf32>
    %c0_35 = arith.constant 0 : index
    %c0_36 = arith.constant 0 : index
    %71 = vector.load %arg11[%c0_35, %c0_36] : memref<1x256xf32, #tpu.memory_space<vmem>>, vector<1x256xf32>
    %72 = vector.broadcast %71 : vector<1x256xf32> to vector<8x256xf32>
    %73 = arith.addf %70, %72 : vector<8x256xf32>
    %74 = vector.extract_strided_slice %73 {offsets = [0, 0], sizes = [8, 128], strides = [1, 1]} : vector<8x256xf32> to vector<8x128xf32>
    %75 = vector.extract_strided_slice %73 {offsets = [0, 128], sizes = [8, 128], strides = [1, 1]} : vector<8x256xf32> to vector<8x128xf32>
    %cst_37 = arith.constant -1.000000e+01 : f32
    %cst_38 = arith.constant 1.000000e+01 : f32
    %76 = vector.broadcast %cst_37 : f32 to vector<8x128xf32>
    %77 = arith.maximumf %76, %75 : vector<8x128xf32>
    %78 = vector.broadcast %cst_38 : f32 to vector<8x128xf32>
    %79 = arith.minimumf %78, %77 : vector<8x128xf32>
    %cst_39 = arith.constant 5.000000e-01 : f32
    %80 = vector.broadcast %cst_39 : f32 to vector<8x128xf32>
    %81 = arith.mulf %80, %79 : vector<8x128xf32>
    %82 = math.exp %81 : vector<8x128xf32>
    %c0_40 = arith.constant 0 : index
    %c0_41 = arith.constant 0 : index
    %83 = vector.load %arg1[%c0_40, %c0_41] : memref<8x128xf32, #tpu.memory_space<vmem>>, vector<8x128xf32>
    %84 = arith.mulf %83, %82 : vector<8x128xf32>
    %85 = arith.addf %74, %84 : vector<8x128xf32>
    %c0_42 = arith.constant 0 : index
    %c0_43 = arith.constant 0 : index
    %86 = vector.load %arg12[%c0_42, %c0_43] : memref<128x128xf32, #tpu.memory_space<vmem>>, vector<128x128xf32>
    %cst_44 = arith.constant dense<0.000000e+00> : vector<8x128xf32>
    %87 = tpu.matmul %85, %86, %cst_44 {dimension_numbers = #tpu.dot_dimension_numbers<[1], [0], [0], [1], [0, 0, 1, 1], [], []>} : vector<8x128xf32>, vector<128x128xf32>, vector<8x128xf32> -> vector<8x128xf32>
    %c0_45 = arith.constant 0 : index
    %c0_46 = arith.constant 0 : index
    %88 = vector.load %arg13[%c0_45, %c0_46] : memref<1x128xf32, #tpu.memory_space<vmem>>, vector<1x128xf32>
    %89 = vector.broadcast %88 : vector<1x128xf32> to vector<8x128xf32>
    %90 = arith.addf %87, %89 : vector<8x128xf32>
    %cst_47 = arith.constant 0.000000e+00 : f32
    %91 = vector.broadcast %cst_47 : f32 to vector<8x128xf32>
    %92 = arith.cmpf oge, %90, %91 : vector<8x128xf32>
    %cst_48 = arith.constant 0.00999999977 : f32
    %93 = vector.broadcast %cst_48 : f32 to vector<8x128xf32>
    %94 = arith.mulf %93, %90 : vector<8x128xf32>
    %95 = arith.select %92, %90, %94 : vector<8x128xi1>, vector<8x128xf32>
    %c0_49 = arith.constant 0 : index
    %c0_50 = arith.constant 0 : index
    %96 = vector.load %arg14[%c0_49, %c0_50] : memref<1x128xf32, #tpu.memory_space<vmem>>, vector<1x128xf32>
    %c0_51 = arith.constant 0 : index
    %c0_52 = arith.constant 0 : index
    %97 = vector.load %arg15[%c0_51, %c0_52] : memref<1x128xf32, #tpu.memory_space<vmem>>, vector<1x128xf32>
    %cst_53 = arith.constant dense<0.000000e+00> : vector<128xf32>
    %98 = vector.multi_reduction <add>, %95, %cst_53 [0] : vector<8x128xf32> to vector<128xf32>
    %99 = vector.shape_cast %98 : vector<128xf32> to vector<1x128xf32>
    %cst_54 = arith.constant 1.250000e-01 : f32
    %100 = vector.broadcast %cst_54 : f32 to vector<1x128xf32>
    %101 = arith.mulf %99, %100 : vector<1x128xf32>
    %102 = vector.broadcast %101 : vector<1x128xf32> to vector<8x128xf32>
    %103 = arith.subf %95, %102 : vector<8x128xf32>
    %104 = arith.mulf %103, %103 : vector<8x128xf32>
    %cst_55 = arith.constant dense<0.000000e+00> : vector<128xf32>
    %105 = vector.multi_reduction <add>, %104, %cst_55 [0] : vector<8x128xf32> to vector<128xf32>
    %106 = vector.shape_cast %105 : vector<128xf32> to vector<1x128xf32>
    %cst_56 = arith.constant 1.250000e-01 : f32
    %107 = vector.broadcast %cst_56 : f32 to vector<1x128xf32>
    %108 = arith.mulf %106, %107 : vector<1x128xf32>
    %cst_57 = arith.constant 9.99999974E-6 : f32
    %109 = vector.broadcast %cst_57 : f32 to vector<1x128xf32>
    %110 = arith.addf %108, %109 : vector<1x128xf32>
    %111 = math.rsqrt %110 : vector<1x128xf32>
    %112 = vector.broadcast %101 : vector<1x128xf32> to vector<8x128xf32>
    %113 = arith.subf %95, %112 : vector<8x128xf32>
    %114 = vector.broadcast %111 : vector<1x128xf32> to vector<8x128xf32>
    %115 = arith.mulf %113, %114 : vector<8x128xf32>
    %116 = vector.broadcast %96 : vector<1x128xf32> to vector<8x128xf32>
    %117 = arith.mulf %115, %116 : vector<8x128xf32>
    %118 = vector.broadcast %97 : vector<1x128xf32> to vector<8x128xf32>
    %119 = arith.addf %117, %118 : vector<8x128xf32>
    %c0_58 = arith.constant 0 : index
    %c0_59 = arith.constant 0 : index
    %120 = vector.load %arg16[%c0_58, %c0_59] : memref<128x128xf32, #tpu.memory_space<vmem>>, vector<128x128xf32>
    %cst_60 = arith.constant dense<0.000000e+00> : vector<8x128xf32>
    %121 = tpu.matmul %119, %120, %cst_60 {dimension_numbers = #tpu.dot_dimension_numbers<[1], [0], [0], [1], [0, 0, 1, 1], [], []>} : vector<8x128xf32>, vector<128x128xf32>, vector<8x128xf32> -> vector<8x128xf32>
    %c0_61 = arith.constant 0 : index
    %c0_62 = arith.constant 0 : index
    %122 = vector.load %arg17[%c0_61, %c0_62] : memref<1x128xf32, #tpu.memory_space<vmem>>, vector<1x128xf32>
    %123 = vector.broadcast %122 : vector<1x128xf32> to vector<8x128xf32>
    %124 = arith.addf %121, %123 : vector<8x128xf32>
    %cst_63 = arith.constant 0.000000e+00 : f32
    %125 = vector.broadcast %cst_63 : f32 to vector<8x128xf32>
    %126 = arith.cmpf oge, %124, %125 : vector<8x128xf32>
    %cst_64 = arith.constant 0.00999999977 : f32
    %127 = vector.broadcast %cst_64 : f32 to vector<8x128xf32>
    %128 = arith.mulf %127, %124 : vector<8x128xf32>
    %129 = arith.select %126, %124, %128 : vector<8x128xi1>, vector<8x128xf32>
    %c0_65 = arith.constant 0 : index
    %c0_66 = arith.constant 0 : index
    %130 = vector.load %arg18[%c0_65, %c0_66] : memref<1x128xf32, #tpu.memory_space<vmem>>, vector<1x128xf32>
    %c0_67 = arith.constant 0 : index
    %c0_68 = arith.constant 0 : index
    %131 = vector.load %arg19[%c0_67, %c0_68] : memref<1x128xf32, #tpu.memory_space<vmem>>, vector<1x128xf32>
    %cst_69 = arith.constant dense<0.000000e+00> : vector<128xf32>
    %132 = vector.multi_reduction <add>, %129, %cst_69 [0] : vector<8x128xf32> to vector<128xf32>
    %133 = vector.shape_cast %132 : vector<128xf32> to vector<1x128xf32>
    %cst_70 = arith.constant 1.250000e-01 : f32
    %134 = vector.broadcast %cst_70 : f32 to vector<1x128xf32>
    %135 = arith.mulf %133, %134 : vector<1x128xf32>
    %136 = vector.broadcast %135 : vector<1x128xf32> to vector<8x128xf32>
    %137 = arith.subf %129, %136 : vector<8x128xf32>
    %138 = arith.mulf %137, %137 : vector<8x128xf32>
    %cst_71 = arith.constant dense<0.000000e+00> : vector<128xf32>
    %139 = vector.multi_reduction <add>, %138, %cst_71 [0] : vector<8x128xf32> to vector<128xf32>
    %140 = vector.shape_cast %139 : vector<128xf32> to vector<1x128xf32>
    %cst_72 = arith.constant 1.250000e-01 : f32
    %141 = vector.broadcast %cst_72 : f32 to vector<1x128xf32>
    %142 = arith.mulf %140, %141 : vector<1x128xf32>
    %cst_73 = arith.constant 9.99999974E-6 : f32
    %143 = vector.broadcast %cst_73 : f32 to vector<1x128xf32>
    %144 = arith.addf %142, %143 : vector<1x128xf32>
    %145 = math.rsqrt %144 : vector<1x128xf32>
    %146 = vector.broadcast %135 : vector<1x128xf32> to vector<8x128xf32>
    %147 = arith.subf %129, %146 : vector<8x128xf32>
    %148 = vector.broadcast %145 : vector<1x128xf32> to vector<8x128xf32>
    %149 = arith.mulf %147, %148 : vector<8x128xf32>
    %150 = vector.broadcast %130 : vector<1x128xf32> to vector<8x128xf32>
    %151 = arith.mulf %149, %150 : vector<8x128xf32>
    %152 = vector.broadcast %131 : vector<1x128xf32> to vector<8x128xf32>
    %153 = arith.addf %151, %152 : vector<8x128xf32>
    %c0_74 = arith.constant 0 : index
    %c0_75 = arith.constant 0 : index
    %154 = vector.load %arg20[%c0_74, %c0_75] : memref<128x128xf32, #tpu.memory_space<vmem>>, vector<128x128xf32>
    %cst_76 = arith.constant dense<0.000000e+00> : vector<8x128xf32>
    %155 = tpu.matmul %153, %154, %cst_76 {dimension_numbers = #tpu.dot_dimension_numbers<[1], [0], [0], [1], [0, 0, 1, 1], [], []>} : vector<8x128xf32>, vector<128x128xf32>, vector<8x128xf32> -> vector<8x128xf32>
    %c0_77 = arith.constant 0 : index
    %c0_78 = arith.constant 0 : index
    %156 = vector.load %arg21[%c0_77, %c0_78] : memref<1x128xf32, #tpu.memory_space<vmem>>, vector<1x128xf32>
    %157 = vector.broadcast %156 : vector<1x128xf32> to vector<8x128xf32>
    %158 = arith.addf %155, %157 : vector<8x128xf32>
    %c0_79 = arith.constant 0 : index
    %c0_80 = arith.constant 0 : index
    %159 = vector.load %arg22[%c0_79, %c0_80] : memref<8x128xf32, #tpu.memory_space<vmem>>, vector<8x128xf32>
    tpu.vector_store %arg22[%c0_79, %c0_80], %158 {strides = array<i32>} : memref<8x128xf32, #tpu.memory_space<vmem>>, vector<8x128xf32>,
    %c0_81 = arith.constant 0 : index
    %c0_82 = arith.constant 0 : index
    %160 = vector.load %arg23[%c0_81, %c0_82] : memref<8x128xf32, #tpu.memory_space<vmem>>, vector<8x128xf32>
    tpu.vector_store %arg23[%c0_81, %c0_82], %74 {strides = array<i32>} : memref<8x128xf32, #tpu.memory_space<vmem>>, vector<8x128xf32>,
    %c0_83 = arith.constant 0 : index
    %c0_84 = arith.constant 0 : index
    %161 = vector.load %arg24[%c0_83, %c0_84] : memref<8x128xf32, #tpu.memory_space<vmem>>, vector<8x128xf32>
    tpu.vector_store %arg24[%c0_83, %c0_84], %79 {strides = array<i32>} : memref<8x128xf32, #tpu.memory_space<vmem>>, vector<8x128xf32>,
    return
  }
}

</mosaic_0001>

<llo_original>
// kernel: tpu_custom_call.1
$region0: #{tpu_custom_call.1}
  #allocation0 [shape = 'u32[]', space=smem, size = 0x4, offset = 0x4, fixed_abs, tag = 'smem constant byte address 0x4 - core index']
  #allocation1 [shape = 'u32[144,128]{1,0:T(1,128)}', space=vmem, size = 0x12000, scoped, tag = 'internal scratch']
  %s0 = inlined_call_operand.hbm [shape: f32[8,128], index: 0, kind: input, shape index: {}]
  %s1 = inlined_call_operand.hbm [shape: f32[8,128], index: 1, kind: input, shape index: {}]
  %s2 = inlined_call_operand.hbm [shape: f32[128,128], index: 2, kind: input, shape index: {}]
  %s3 = inlined_call_operand.vmem [shape: f32[1,128], index: 3, kind: input, shape index: {}]
  %s4 = inlined_call_operand.vmem [shape: f32[1,128], index: 4, kind: input, shape index: {}]
  %s5 = inlined_call_operand.vmem [shape: f32[1,128], index: 5, kind: input, shape index: {}]
  %s6 = inlined_call_operand.hbm [shape: f32[128,128], index: 6, kind: input, shape index: {}]
  %s7 = inlined_call_operand.vmem [shape: f32[1,128], index: 7, kind: input, shape index: {}]
  %s8 = inlined_call_operand.vmem [shape: f32[1,128], index: 8, kind: input, shape index: {}]
  %s9 = inlined_call_operand.vmem [shape: f32[1,128], index: 9, kind: input, shape index: {}]
  %s10 = inlined_call_operand.hbm [shape: f32[128,256], index: 10, kind: input, shape index: {}]
  %s11 = inlined_call_operand.vmem [shape: f32[1,256], index: 11, kind: input, shape index: {}]
  %s12 = inlined_call_operand.hbm [shape: f32[128,128], index: 12, kind: input, shape index: {}]
  %s13 = inlined_call_operand.vmem [shape: f32[1,128], index: 13, kind: input, shape index: {}]
  %s14 = inlined_call_operand.vmem [shape: f32[1,128], index: 14, kind: input, shape index: {}]
  %s15 = inlined_call_operand.vmem [shape: f32[1,128], index: 15, kind: input, shape index: {}]
  %s16 = inlined_call_operand.hbm [shape: f32[128,128], index: 16, kind: input, shape index: {}]
  %s17 = inlined_call_operand.vmem [shape: f32[1,128], index: 17, kind: input, shape index: {}]
  %s18 = inlined_call_operand.vmem [shape: f32[1,128], index: 18, kind: input, shape index: {}]
  %s19 = inlined_call_operand.vmem [shape: f32[1,128], index: 19, kind: input, shape index: {}]
  %s20 = inlined_call_operand.hbm [shape: f32[128,128], index: 20, kind: input, shape index: {}]
  %s21 = inlined_call_operand.vmem [shape: f32[1,128], index: 21, kind: input, shape index: {}]
  %s22 = inlined_call_operand.hbm [shape: f32[8,128], index: 22, kind: output, shape index: {0}]
  %s23 = inlined_call_operand.hbm [shape: f32[8,128], index: 23, kind: output, shape index: {1}]
  %s24 = inlined_call_operand.hbm [shape: f32[8,128], index: 24, kind: output, shape index: {2}]
  %25 = xla_tuple %s22, %s23, %s24
  %s26 = sld [smem:[#allocation0]]
  $region146: #{tpu_custom_call.1} parent=0
    _
  %s28 = ssub.s32 1, %s26
  %s29 = scalar_select 0, %s28, %s26
  $region1: #{tpu_custom_call.1} parent=0
    #allocation2 [shape = 'u8[4096]{0}', space=vmem, size = 0x1000, scoped, tag = 'input window, operand 0, single buffered']
    #allocation3 [shape = 's32[1]{0}', space=sflag, size = 0x4, scoped, tag = 'scoped memory for tpu_custom_call.1']
    #allocation4 [shape = 's32[1]{0}', space=sflag, size = 0x4, scoped, tag = 'scoped memory for tpu_custom_call.1']
    #allocation5 [shape = 'u8[4096]{0}', space=vmem, size = 0x1000, scoped, tag = 'input window, operand 1, single buffered']
    #allocation6 [shape = 's32[1]{0}', space=sflag, size = 0x4, scoped, tag = 'scoped memory for tpu_custom_call.1']
    #allocation7 [shape = 'u8[65536]{0}', space=vmem, size = 0x10000, scoped, tag = 'input window, operand 2, single buffered']
    #allocation8 [shape = 'u8[65536]{0}', space=vmem, size = 0x10000, scoped, tag = 'input window, operand 6, single buffered']
    #allocation9 [shape = 's32[1]{0}', space=sflag, size = 0x4, scoped, tag = 'scoped memory for tpu_custom_call.1']
    #allocation10 [shape = 'u8[131072]{0}', space=vmem, size = 0x20000, scoped, tag = 'input window, operand 10, single buffered']
    #allocation11 [shape = 'u8[65536]{0}', space=vmem, size = 0x10000, scoped, tag = 'input window, operand 12, single buffered']
    #allocation12 [shape = 's32[1]{0}', space=sflag, size = 0x4, scoped, tag = 'scoped memory for tpu_custom_call.1']
    #allocation13 [shape = 'u8[65536]{0}', space=vmem, size = 0x10000, scoped, tag = 'input window, operand 16, single buffered']
    #allocation14 [shape = 'u8[65536]{0}', space=vmem, size = 0x10000, scoped, tag = 'input window, operand 20, single buffered']
    #allocation15 [shape = 's32[1]{0}', space=sflag, size = 0x4, scoped, tag = 'scoped memory for tpu_custom_call.1']
    #allocation16 [shape = 'u8[4096]{0}', space=vmem, size = 0x1000, scoped, tag = 'output window, operand 0, single buffered']
    #allocation17 [shape = 'u8[4096]{0}', space=vmem, size = 0x1000, scoped, tag = 'output window, operand 1, single buffered']
    #allocation18 [shape = 's32[1]{0}', space=sflag, size = 0x4, scoped, tag = 'scoped memory for tpu_custom_call.1']
    #allocation19 [shape = 'u8[4096]{0}', space=vmem, size = 0x1000, scoped, tag = 'output window, operand 2, single buffered']
    %30 = vsyncpa [#allocation3], 0
    %31 = vsyncpa [#allocation6], 0
    %32 = vsyncpa [#allocation9], 0
    %33 = vsyncpa [#allocation12], 0
    %34 = vsyncpa [#allocation15], 0
    %35 = vsyncpa [#allocation4], 0
    %36 = vsyncpa [#allocation18], 0
    // Predicated region
    $region2: #{tpu_custom_call.1} parent=1 // pred_check
      _
    $region3: #{tpu_custom_call.1} parent=1 // pred_check_branch
      %38 = sbr.rel (0) target = $region5
    $region4: #{tpu_custom_call.1} parent=1 // pred_region
      %s40 = ssub.s32 128, 128
      %41 = vsyncadd [#allocation3], %s40
      %s43 = sshll.u32 [#allocation2], 4
      %s44 = int_to_ptr.vmem [resolvable:$true] %s43
      %46 = dma.hbm_to_vmem [thread:$0]  %s0, 128, %s44, [#allocation3]
    $region5: #{tpu_custom_call.1} parent=1 // pred_fallthru
      _
    // Predicated region
    $region6: #{tpu_custom_call.1} parent=1 // pred_check
      _
    $region7: #{tpu_custom_call.1} parent=1 // pred_check_branch
      %48 = sbr.rel (0) target = $region9
    $region8: #{tpu_custom_call.1} parent=1 // pred_region
      %s50 = ssub.s32 128, 128
      %51 = vsyncadd [#allocation6], %s50
      %s53 = sshll.u32 [#allocation5], 4
      %s54 = int_to_ptr.vmem [resolvable:$true] %s53
      %56 = dma.hbm_to_vmem [thread:$0]  %s1, 128, %s54, [#allocation6]
    $region9: #{tpu_custom_call.1} parent=1 // pred_fallthru
      _
    // Predicated region
    $region10: #{tpu_custom_call.1} parent=1 // pred_check
      _
    $region11: #{tpu_custom_call.1} parent=1 // pred_check_branch
      %58 = sbr.rel (0) target = $region13
    $region12: #{tpu_custom_call.1} parent=1 // pred_region
      %s60 = ssub.s32 2048, 2048
      %61 = vsyncadd [#allocation6], %s60
      %s62 = sshll.u32 [#allocation7], 4
      %s63 = int_to_ptr.vmem [resolvable:$true] %s62
      %68 = dma.hbm_to_vmem [thread:$0]  %s2, 2048, %s63, [#allocation6], 128, 128, 8
    $region13: #{tpu_custom_call.1} parent=1 // pred_fallthru
      _
    // Predicated region
    $region14: #{tpu_custom_call.1} parent=1 // pred_check
      _
    $region15: #{tpu_custom_call.1} parent=1 // pred_check_branch
      %70 = sbr.rel (0) target = $region17
    $region16: #{tpu_custom_call.1} parent=1 // pred_region
      _
    $region17: #{tpu_custom_call.1} parent=1 // pred_fallthru
      _
    // Predicated region
    $region18: #{tpu_custom_call.1} parent=1 // pred_check
      _
    $region19: #{tpu_custom_call.1} parent=1 // pred_check_branch
      %72 = sbr.rel (0) target = $region21
    $region20: #{tpu_custom_call.1} parent=1 // pred_region
      _
    $region21: #{tpu_custom_call.1} parent=1 // pred_fallthru
      _
    // Predicated region
    $region22: #{tpu_custom_call.1} parent=1 // pred_check
      _
    $region23: #{tpu_custom_call.1} parent=1 // pred_check_branch
      %74 = sbr.rel (0) target = $region25
    $region24: #{tpu_custom_call.1} parent=1 // pred_region
      _
    $region25: #{tpu_custom_call.1} parent=1 // pred_fallthru
      _
    // Predicated region
    $region26: #{tpu_custom_call.1} parent=1 // pred_check
      _
    $region27: #{tpu_custom_call.1} parent=1 // pred_check_branch
      %76 = sbr.rel (0) target = $region29
    $region28: #{tpu_custom_call.1} parent=1 // pred_region
      %s78 = ssub.s32 2048, 2048
      %79 = vsyncadd [#allocation9], %s78
      %s80 = sshll.u32 [#allocation8], 4
      %s81 = int_to_ptr.vmem [resolvable:$true] %s80
      %86 = dma.hbm_to_vmem [thread:$0]  %s6, 2048, %s81, [#allocation9], 128, 128, 8
    $region29: #{tpu_custom_call.1} parent=1 // pred_fallthru
      _
    // Predicated region
    $region30: #{tpu_custom_call.1} parent=1 // pred_check
      _
    $region31: #{tpu_custom_call.1} parent=1 // pred_check_branch
      %88 = sbr.rel (0) target = $region33
    $region32: #{tpu_custom_call.1} parent=1 // pred_region
      _
    $region33: #{tpu_custom_call.1} parent=1 // pred_fallthru
      _
    // Predicated region
    $region34: #{tpu_custom_call.1} parent=1 // pred_check
      _
    $region35: #{tpu_custom_call.1} parent=1 // pred_check_branch
      %90 = sbr.rel (0) target = $region37
    $region36: #{tpu_custom_call.1} parent=1 // pred_region
      _
    $region37: #{tpu_custom_call.1} parent=1 // pred_fallthru
      _
    // Predicated region
    $region38: #{tpu_custom_call.1} parent=1 // pred_check
      _
    $region39: #{tpu_custom_call.1} parent=1 // pred_check_branch
      %92 = sbr.rel (0) target = $region41
    $region40: #{tpu_custom_call.1} parent=1 // pred_region
      _
    $region41: #{tpu_custom_call.1} parent=1 // pred_fallthru
      _
    // Predicated region
    $region42: #{tpu_custom_call.1} parent=1 // pred_check
      _
    $region43: #{tpu_custom_call.1} parent=1 // pred_check_branch
      %94 = sbr.rel (0) target = $region45
    $region44: #{tpu_custom_call.1} parent=1 // pred_region
      %s96 = ssub.s32 4096, 4096
      %97 = vsyncadd [#allocation9], %s96
      %s98 = sshll.u32 [#allocation10], 4
      %s99 = int_to_ptr.vmem [resolvable:$true] %s98
      %104 = dma.hbm_to_vmem [thread:$0]  %s10, 4096, %s99, [#allocation9], 256, 256, 16
    $region45: #{tpu_custom_call.1} parent=1 // pred_fallthru
      _
    // Predicated region
    $region46: #{tpu_custom_call.1} parent=1 // pred_check
      _
    $region47: #{tpu_custom_call.1} parent=1 // pred_check_branch
      %106 = sbr.rel (0) target = $region49
    $region48: #{tpu_custom_call.1} parent=1 // pred_region
      _
    $region49: #{tpu_custom_call.1} parent=1 // pred_fallthru
      _
    // Predicated region
    $region50: #{tpu_custom_call.1} parent=1 // pred_check
      _
    $region51: #{tpu_custom_call.1} parent=1 // pred_check_branch
      %108 = sbr.rel (0) target = $region53
    $region52: #{tpu_custom_call.1} parent=1 // pred_region
      %s110 = ssub.s32 2048, 2048
      %111 = vsyncadd [#allocation12], %s110
      %s112 = sshll.u32 [#allocation11], 4
      %s113 = int_to_ptr.vmem [resolvable:$true] %s112
      %118 = dma.hbm_to_vmem [thread:$0]  %s12, 2048, %s113, [#allocation12], 128, 128, 8
    $region53: #{tpu_custom_call.1} parent=1 // pred_fallthru
      _
    // Predicated region
    $region54: #{tpu_custom_call.1} parent=1 // pred_check
      _
    $region55: #{tpu_custom_call.1} parent=1 // pred_check_branch
      %120 = sbr.rel (0) target = $region57
    $region56: #{tpu_custom_call.1} parent=1 // pred_region
      _
    $region57: #{tpu_custom_call.1} parent=1 // pred_fallthru
      _
    // Predicated region
    $region58: #{tpu_custom_call.1} parent=1 // pred_check
      _
    $region59: #{tpu_custom_call.1} parent=1 // pred_check_branch
      %122 = sbr.rel (0) target = $region61
    $region60: #{tpu_custom_call.1} parent=1 // pred_region
      _
    $region61: #{tpu_custom_call.1} parent=1 // pred_fallthru
      _
    // Predicated region
    $region62: #{tpu_custom_call.1} parent=1 // pred_check
      _
    $region63: #{tpu_custom_call.1} parent=1 // pred_check_branch
      %124 = sbr.rel (0) target = $region65
    $region64: #{tpu_custom_call.1} parent=1 // pred_region
      _
    $region65: #{tpu_custom_call.1} parent=1 // pred_fallthru
      _
    // Predicated region
    $region66: #{tpu_custom_call.1} parent=1 // pred_check
      _
    $region67: #{tpu_custom_call.1} parent=1 // pred_check_branch
      %126 = sbr.rel (0) target = $region69
    $region68: #{tpu_custom_call.1} parent=1 // pred_region
      %s128 = ssub.s32 2048, 2048
      %129 = vsyncadd [#allocation12], %s128
      %s130 = sshll.u32 [#allocation13], 4
      %s131 = int_to_ptr.vmem [resolvable:$true] %s130
      %136 = dma.hbm_to_vmem [thread:$0]  %s16, 2048, %s131, [#allocation12], 128, 128, 8
    $region69: #{tpu_custom_call.1} parent=1 // pred_fallthru
      _
    // Predicated region
    $region70: #{tpu_custom_call.1} parent=1 // pred_check
      _
    $region71: #{tpu_custom_call.1} parent=1 // pred_check_branch
      %138 = sbr.rel (0) target = $region73
    $region72: #{tpu_custom_call.1} parent=1 // pred_region
      _
    $region73: #{tpu_custom_call.1} parent=1 // pred_fallthru
      _
    // Predicated region
    $region74: #{tpu_custom_call.1} parent=1 // pred_check
      _
    $region75: #{tpu_custom_call.1} parent=1 // pred_check_branch
      %140 = sbr.rel (0) target = $region77
    $region76: #{tpu_custom_call.1} parent=1 // pred_region
      _
    $region77: #{tpu_custom_call.1} parent=1 // pred_fallthru
      _
    // Predicated region
    $region78: #{tpu_custom_call.1} parent=1 // pred_check
      _
    $region79: #{tpu_custom_call.1} parent=1 // pred_check_branch
      %142 = sbr.rel (0) target = $region81
    $region80: #{tpu_custom_call.1} parent=1 // pred_region
      _
    $region81: #{tpu_custom_call.1} parent=1 // pred_fallthru
      _
    // Predicated region
    $region82: #{tpu_custom_call.1} parent=1 // pred_check
      _
    $region83: #{tpu_custom_call.1} parent=1 // pred_check_branch
      %144 = sbr.rel (0) target = $region85
    $region84: #{tpu_custom_call.1} parent=1 // pred_region
      %s146 = ssub.s32 2048, 2048
      %147 = vsyncadd [#allocation15], %s146
      %s148 = sshll.u32 [#allocation14], 4
      %s149 = int_to_ptr.vmem [resolvable:$true] %s148
      %154 = dma.hbm_to_vmem [thread:$0]  %s20, 2048, %s149, [#allocation15], 128, 128, 8
    $region85: #{tpu_custom_call.1} parent=1 // pred_fallthru
      _
    // Predicated region
    $region86: #{tpu_custom_call.1} parent=1 // pred_check
      _
    $region87: #{tpu_custom_call.1} parent=1 // pred_check_branch
      %156 = sbr.rel (0) target = $region89
    $region88: #{tpu_custom_call.1} parent=1 // pred_region
      _
    $region89: #{tpu_custom_call.1} parent=1 // pred_fallthru
      _
    // Predicated region
    $region90: #{tpu_custom_call.1} parent=1 // pred_check
      _
    $region91: #{tpu_custom_call.1} parent=1 // pred_check_branch
      %158 = sbr.rel (0) target = $region93
    $region92: #{tpu_custom_call.1} parent=1 // pred_region
      %159 = dma.done [#allocation3], 128
    $region93: #{tpu_custom_call.1} parent=1 // pred_fallthru
      _
    // Predicated region
    $region94: #{tpu_custom_call.1} parent=1 // pred_check
      _
    $region95: #{tpu_custom_call.1} parent=1 // pred_check_branch
      %161 = sbr.rel (0) target = $region97
    $region96: #{tpu_custom_call.1} parent=1 // pred_region
      %162 = dma.done [#allocation6], 128
    $region97: #{tpu_custom_call.1} parent=1 // pred_fallthru
      _
    // Predicated region
    $region98: #{tpu_custom_call.1} parent=1 // pred_check
      _
    $region99: #{tpu_custom_call.1} parent=1 // pred_check_branch
      %164 = sbr.rel (0) target = $region101
    $region100: #{tpu_custom_call.1} parent=1 // pred_region
      %165 = dma.done [#allocation6], 2048
    $region101: #{tpu_custom_call.1} parent=1 // pred_fallthru
      _
    // Predicated region
    $region102: #{tpu_custom_call.1} parent=1 // pred_check
      _
    $region103: #{tpu_custom_call.1} parent=1 // pred_check_branch
      %167 = sbr.rel (0) target = $region105
    $region104: #{tpu_custom_call.1} parent=1 // pred_region
      %168 = dma.done [#allocation9], 2048
    $region105: #{tpu_custom_call.1} parent=1 // pred_fallthru
      _
    // Predicated region
    $region106: #{tpu_custom_call.1} parent=1 // pred_check
      _
    $region107: #{tpu_custom_call.1} parent=1 // pred_check_branch
      %170 = sbr.rel (0) target = $region109
    $region108: #{tpu_custom_call.1} parent=1 // pred_region
      %171 = dma.done [#allocation9], 4096
    $region109: #{tpu_custom_call.1} parent=1 // pred_fallthru
      _
    // Predicated region
    $region110: #{tpu_custom_call.1} parent=1 // pred_check
      _
    $region111: #{tpu_custom_call.1} parent=1 // pred_check_branch
      %173 = sbr.rel (0) target = $region113
    $region112: #{tpu_custom_call.1} parent=1 // pred_region
      %174 = dma.done [#allocation12], 2048
    $region113: #{tpu_custom_call.1} parent=1 // pred_fallthru
      _
    // Predicated region
    $region114: #{tpu_custom_call.1} parent=1 // pred_check
      _
    $region115: #{tpu_custom_call.1} parent=1 // pred_check_branch
      %176 = sbr.rel (0) target = $region117
    $region116: #{tpu_custom_call.1} parent=1 // pred_region
      %177 = dma.done [#allocation12], 2048
    $region117: #{tpu_custom_call.1} parent=1 // pred_fallthru
      _
    // Predicated region
    $region118: #{tpu_custom_call.1} parent=1 // pred_check
      _
    $region119: #{tpu_custom_call.1} parent=1 // pred_check_branch
      %179 = sbr.rel (0) target = $region121
    $region120: #{tpu_custom_call.1} parent=1 // pred_region
      %180 = dma.done [#allocation15], 2048
    $region121: #{tpu_custom_call.1} parent=1 // pred_fallthru
      _
    %v181 = vld [vmem:[#allocation2] sm:$0xff]
    %v182 = vld [vmem:[#allocation7] sm:$0xff]
    %v183 = vld [vmem:[#allocation7 + $0x8] sm:$0xff]
    %v184 = vld [vmem:[#allocation7 + $0x10] sm:$0xff]
    %v185 = vld [vmem:[#allocation7 + $0x18] sm:$0xff]
    %v186 = vld [vmem:[#allocation7 + $0x20] sm:$0xff]
    %v187 = vld [vmem:[#allocation7 + $0x28] sm:$0xff]
    %v188 = vld [vmem:[#allocation7 + $0x30] sm:$0xff]
    %v189 = vld [vmem:[#allocation7 + $0x38] sm:$0xff]
    %v190 = vld [vmem:[#allocation7 + $0x40] sm:$0xff]
    %v191 = vld [vmem:[#allocation7 + $0x48] sm:$0xff]
    %v192 = vld [vmem:[#allocation7 + $0x50] sm:$0xff]
    %v193 = vld [vmem:[#allocation7 + $0x58] sm:$0xff]
    %v194 = vld [vmem:[#allocation7 + $0x60] sm:$0xff]
    %v195 = vld [vmem:[#allocation7 + $0x68] sm:$0xff]
    %v196 = vld [vmem:[#allocation7 + $0x70] sm:$0xff]
    %v197 = vld [vmem:[#allocation7 + $0x78] sm:$0xff]
    %v198 = vld [vmem:[%s3] sm:$0x1]
    %v200 = vlaneseq
    %v201 = vshrl.u32 %v200, 7
    %v202 = vsub.s32 0, %v201
    %v203 = vrot.slane %v198, %v202
    %205 = vmatprep.subr.mxu0 0.0
    %206 = vmatpush1.msra.mxu0 %v182
    %207 = vmatprep.subr.mxu0 0.0
    %208 = vmatpush1.msra.mxu0 %v183
    %209 = vmatprep.subr.mxu0 0.0
    %210 = vmatpush1.msra.mxu0 %v184
    %211 = vmatprep.subr.mxu0 0.0
    %212 = vmatpush1.msra.mxu0 %v185
    %213 = vmatprep.subr.mxu0 0.0
    %214 = vmatpush1.msra.mxu0 %v186
    %215 = vmatprep.subr.mxu0 0.0
    %216 = vmatpush1.msra.mxu0 %v187
    %217 = vmatprep.subr.mxu0 0.0
    %218 = vmatpush1.msra.mxu0 %v188
    %219 = vmatprep.subr.mxu0 0.0
    %220 = vmatpush1.msra.mxu0 %v189
    %221 = vmatprep.subr.mxu0 0.0
    %222 = vmatpush1.msra.mxu0 %v190
    %223 = vmatprep.subr.mxu0 0.0
    %224 = vmatpush1.msra.mxu0 %v191
    %225 = vmatprep.subr.mxu0 0.0
    %226 = vmatpush1.msra.mxu0 %v192
    %227 = vmatprep.subr.mxu0 0.0
    %228 = vmatpush1.msra.mxu0 %v193
    %229 = vmatprep.subr.mxu0 0.0
    %230 = vmatpush1.msra.mxu0 %v194
    %231 = vmatprep.subr.mxu0 0.0
    %232 = vmatpush1.msra.mxu0 %v195
    %233 = vmatprep.subr.mxu0 0.0
    %234 = vmatpush1.msra.mxu0 %v196
    %235 = vmatprep.subr.mxu0 0.0
    %236 = vmatpush1.msra.mxu0 %v197
    %237 = vmatprep.subr.mxu0 0.0
    %238 = vmatpush1.msra.mxu0 0.0
    %239 = vmatprep.subr.mxu0 0.0
    %240 = vmatpush1.msra.mxu0 0.0
    %241 = vmatprep.subr.mxu0 0.0
    %242 = vmatpush1.msra.mxu0 0.0
    %243 = vmatprep.subr.mxu0 0.0
    %244 = vmatpush1.msra.mxu0 0.0
    %245 = vmatprep.subr.mxu0 0.0
    %246 = vmatpush1.msra.mxu0 0.0
    %247 = vmatprep.subr.mxu0 0.0
    %248 = vmatpush1.msra.mxu0 0.0
    %249 = vmatprep.subr.mxu0 0.0
    %250 = vmatpush1.msra.mxu0 0.0
    %251 = vmatprep.subr.mxu0 0.0
    %252 = vmatpush1.msra.mxu0 0.0
    %253 = vmatprep.subr.mxu0 0.0
    %254 = vmatpush1.msra.mxu0 0.0
    %255 = vmatprep.subr.mxu0 0.0
    %256 = vmatpush1.msra.mxu0 0.0
    %257 = vmatprep.subr.mxu0 0.0
    %258 = vmatpush1.msra.mxu0 0.0
    %259 = vmatprep.subr.mxu0 0.0
    %260 = vmatpush1.msra.mxu0 0.0
    %261 = vmatprep.subr.mxu0 0.0
    %262 = vmatpush1.msra.mxu0 0.0
    %263 = vmatprep.subr.mxu0 0.0
    %264 = vmatpush1.msra.mxu0 0.0
    %265 = vmatprep.subr.mxu0 0.0
    %266 = vmatpush1.msra.mxu0 0.0
    %267 = vmatprep.subr.mxu0 0.0
    %268 = vmatpush1.msra.mxu0 0.0
    %269 = vmatprep.mubr.f32.mxu0 0.0
    %270 = vmatmul.mubr.f32.gmra.mrb[0].mxu0 %v181
    %v271 = vpop.f32.mrb[0].mxu0
    %v272 = vadd.f32 %v203, %v271
    %v273 = vpop.f32.mrb[0].mxu0
    %274 = vdwg.mxu0
    %vm275 = vcmp.ge.f32.partialorder %v272, 0.0
    %v276 = vmul.f32 %v272, 0.01
    %v277 = vsel %vm275, %v272, %v276
    %v278 = vld [vmem:[%s4] sm:$0x1]
    %v279 = vld [vmem:[%s5] sm:$0x1]
    %v280 = vrot.slane %v277, 4
    %v281 = vadd.f32 %v277, %v280
    %v282 = vrot.slane %v281, 2
    %v283 = vadd.f32 %v281, %v282
    %v284 = vrot.slane %v283, 1
    %v285 = vadd.f32 %v283, %v284
    %v286 = vmul.f32 %v285, 0.125
    %v287 = vsub.f32 %v277, %v286
    %v288 = vmul.f32 %v287, %v287
    %v289 = vrot.slane %v288, 4
    %v290 = vadd.f32 %v288, %v289
    %v291 = vrot.slane %v290, 2
    %v292 = vadd.f32 %v290, %v291
    %v293 = vrot.slane %v292, 1
    %v294 = vadd.f32 %v292, %v293
    %v295 = vmul.f32 %v294, 0.125
    %v296 = vadd.f32 %v295, 1e-05
    %v297 = vrsqrt.pop %v296
    %v298 = vmul.f32 %v287, %v297
    %v300 = vlaneseq
    %v301 = vshrl.u32 %v300, 7
    %v302 = vsub.s32 0, %v301
    %v303 = vrot.slane %v278, %v302
    %v305 = vmul.f32 %v298, %v303
    %v307 = vlaneseq
    %v308 = vshrl.u32 %v307, 7
    %v309 = vsub.s32 0, %v308
    %v310 = vrot.slane %v279, %v309
    %v312 = vadd.f32 %v305, %v310
    %v313 = vld [vmem:[#allocation8] sm:$0xff]
    %v314 = vld [vmem:[#allocation8 + $0x8] sm:$0xff]
    %v315 = vld [vmem:[#allocation8 + $0x10] sm:$0xff]
    %v316 = vld [vmem:[#allocation8 + $0x18] sm:$0xff]
    %v317 = vld [vmem:[#allocation8 + $0x20] sm:$0xff]
    %v318 = vld [vmem:[#allocation8 + $0x28] sm:$0xff]
    %v319 = vld [vmem:[#allocation8 + $0x30] sm:$0xff]
    %v320 = vld [vmem:[#allocation8 + $0x38] sm:$0xff]
    %v321 = vld [vmem:[#allocation8 + $0x40] sm:$0xff]
    %v322 = vld [vmem:[#allocation8 + $0x48] sm:$0xff]
    %v323 = vld [vmem:[#allocation8 + $0x50] sm:$0xff]
    %v324 = vld [vmem:[#allocation8 + $0x58] sm:$0xff]
    %v325 = vld [vmem:[#allocation8 + $0x60] sm:$0xff]
    %v326 = vld [vmem:[#allocation8 + $0x68] sm:$0xff]
    %v327 = vld [vmem:[#allocation8 + $0x70] sm:$0xff]
    %v328 = vld [vmem:[#allocation8 + $0x78] sm:$0xff]
    %v329 = vld [vmem:[%s7] sm:$0x1]
    %v331 = vlaneseq
    %v332 = vshrl.u32 %v331, 7
    %v333 = vsub.s32 0, %v332
    %v334 = vrot.slane %v329, %v333
    %336 = vmatprep.subr.mxu0 0.0
    %337 = vmatpush1.msra.mxu0 %v313
    %338 = vmatprep.subr.mxu0 0.0
    %339 = vmatpush1.msra.mxu0 %v314
    %340 = vmatprep.subr.mxu0 0.0
    %341 = vmatpush1.msra.mxu0 %v315
    %342 = vmatprep.subr.mxu0 0.0
    %343 = vmatpush1.msra.mxu0 %v316
    %344 = vmatprep.subr.mxu0 0.0
    %345 = vmatpush1.msra.mxu0 %v317
    %346 = vmatprep.subr.mxu0 0.0
    %347 = vmatpush1.msra.mxu0 %v318
    %348 = vmatprep.subr.mxu0 0.0
    %349 = vmatpush1.msra.mxu0 %v319
    %350 = vmatprep.subr.mxu0 0.0
    %351 = vmatpush1.msra.mxu0 %v320
    %352 = vmatprep.subr.mxu0 0.0
    %353 = vmatpush1.msra.mxu0 %v321
    %354 = vmatprep.subr.mxu0 0.0
    %355 = vmatpush1.msra.mxu0 %v322
    %356 = vmatprep.subr.mxu0 0.0
    %357 = vmatpush1.msra.mxu0 %v323
    %358 = vmatprep.subr.mxu0 0.0
    %359 = vmatpush1.msra.mxu0 %v324
    %360 = vmatprep.subr.mxu0 0.0
    %361 = vmatpush1.msra.mxu0 %v325
    %362 = vmatprep.subr.mxu0 0.0
    %363 = vmatpush1.msra.mxu0 %v326
    %364 = vmatprep.subr.mxu0 0.0
    %365 = vmatpush1.msra.mxu0 %v327
    %366 = vmatprep.subr.mxu0 0.0
    %367 = vmatpush1.msra.mxu0 %v328
    %368 = vmatprep.subr.mxu0 0.0
    %369 = vmatpush1.msra.mxu0 0.0
    %370 = vmatprep.subr.mxu0 0.0
    %371 = vmatpush1.msra.mxu0 0.0
    %372 = vmatprep.subr.mxu0 0.0
    %373 = vmatpush1.msra.mxu0 0.0
    %374 = vmatprep.subr.mxu0 0.0
    %375 = vmatpush1.msra.mxu0 0.0
    %376 = vmatprep.subr.mxu0 0.0
    %377 = vmatpush1.msra.mxu0 0.0
    %378 = vmatprep.subr.mxu0 0.0
    %379 = vmatpush1.msra.mxu0 0.0
    %380 = vmatprep.subr.mxu0 0.0
    %381 = vmatpush1.msra.mxu0 0.0
    %382 = vmatprep.subr.mxu0 0.0
    %383 = vmatpush1.msra.mxu0 0.0
    %384 = vmatprep.subr.mxu0 0.0
    %385 = vmatpush1.msra.mxu0 0.0
    %386 = vmatprep.subr.mxu0 0.0
    %387 = vmatpush1.msra.mxu0 0.0
    %388 = vmatprep.subr.mxu0 0.0
    %389 = vmatpush1.msra.mxu0 0.0
    %390 = vmatprep.subr.mxu0 0.0
    %391 = vmatpush1.msra.mxu0 0.0
    %392 = vmatprep.subr.mxu0 0.0
    %393 = vmatpush1.msra.mxu0 0.0
    %394 = vmatprep.subr.mxu0 0.0
    %395 = vmatpush1.msra.mxu0 0.0
    %396 = vmatprep.subr.mxu0 0.0
    %397 = vmatpush1.msra.mxu0 0.0
    %398 = vmatprep.subr.mxu0 0.0
    %399 = vmatpush1.msra.mxu0 0.0
    %400 = vmatprep.mubr.f32.mxu0 0.0
    %401 = vmatmul.mubr.f32.gmra.mrb[0].mxu0 %v312
    %v402 = vpop.f32.mrb[0].mxu0
    %v403 = vadd.f32 %v334, %v402
    %v404 = vpop.f32.mrb[0].mxu0
    %405 = vdwg.mxu0
    %vm406 = vcmp.ge.f32.partialorder %v403, 0.0
    %v407 = vmul.f32 %v403, 0.01
    %v408 = vsel %vm406, %v403, %v407
    %v409 = vld [vmem:[%s8] sm:$0x1]
    %v410 = vld [vmem:[%s9] sm:$0x1]
    %v411 = vrot.slane %v408, 4
    %v412 = vadd.f32 %v408, %v411
    %v413 = vrot.slane %v412, 2
    %v414 = vadd.f32 %v412, %v413
    %v415 = vrot.slane %v414, 1
    %v416 = vadd.f32 %v414, %v415
    %v417 = vmul.f32 %v416, 0.125
    %v418 = vsub.f32 %v408, %v417
    %v419 = vmul.f32 %v418, %v418
    %v420 = vrot.slane %v419, 4
    %v421 = vadd.f32 %v419, %v420
    %v422 = vrot.slane %v421, 2
    %v423 = vadd.f32 %v421, %v422
    %v424 = vrot.slane %v423, 1
    %v425 = vadd.f32 %v423, %v424
    %v426 = vmul.f32 %v425, 0.125
    %v427 = vadd.f32 %v426, 1e-05
    %v428 = vrsqrt.pop %v427
    %v429 = vmul.f32 %v418, %v428
    %v431 = vlaneseq
    %v432 = vshrl.u32 %v431, 7
    %v433 = vsub.s32 0, %v432
    %v434 = vrot.slane %v409, %v433
    %v436 = vmul.f32 %v429, %v434
    %v438 = vlaneseq
    %v439 = vshrl.u32 %v438, 7
    %v440 = vsub.s32 0, %v439
    %v441 = vrot.slane %v410, %v440
    %v443 = vadd.f32 %v436, %v441
    %v444 = vld [vmem:[#allocation10] sm:$0xff]
    %v445 = vld [vmem:[#allocation10 + $0x8] sm:$0xff]
    %v446 = vld [vmem:[#allocation10 + $0x10] sm:$0xff]
    %v447 = vld [vmem:[#allocation10 + $0x18] sm:$0xff]
    %v448 = vld [vmem:[#allocation10 + $0x20] sm:$0xff]
    %v449 = vld [vmem:[#allocation10 + $0x28] sm:$0xff]
    %v450 = vld [vmem:[#allocation10 + $0x30] sm:$0xff]
    %v451 = vld [vmem:[#allocation10 + $0x38] sm:$0xff]
    %v452 = vld [vmem:[#allocation10 + $0x40] sm:$0xff]
    %v453 = vld [vmem:[#allocation10 + $0x48] sm:$0xff]
    %v454 = vld [vmem:[#allocation10 + $0x50] sm:$0xff]
    %v455 = vld [vmem:[#allocation10 + $0x58] sm:$0xff]
    %v456 = vld [vmem:[#allocation10 + $0x60] sm:$0xff]
    %v457 = vld [vmem:[#allocation10 + $0x68] sm:$0xff]
    %v458 = vld [vmem:[#allocation10 + $0x70] sm:$0xff]
    %v459 = vld [vmem:[#allocation10 + $0x78] sm:$0xff]
    %v460 = vld [vmem:[#allocation10 + $0x80] sm:$0xff]
    %v461 = vld [vmem:[#allocation10 + $0x88] sm:$0xff]
    %v462 = vld [vmem:[#allocation10 + $0x90] sm:$0xff]
    %v463 = vld [vmem:[#allocation10 + $0x98] sm:$0xff]
    %v464 = vld [vmem:[#allocation10 + $0xa0] sm:$0xff]
    %v465 = vld [vmem:[#allocation10 + $0xa8] sm:$0xff]
    %v466 = vld [vmem:[#allocation10 + $0xb0] sm:$0xff]
    %v467 = vld [vmem:[#allocation10 + $0xb8] sm:$0xff]
    %v468 = vld [vmem:[#allocation10 + $0xc0] sm:$0xff]
    %v469 = vld [vmem:[#allocation10 + $0xc8] sm:$0xff]
    %v470 = vld [vmem:[#allocation10 + $0xd0] sm:$0xff]
    %v471 = vld [vmem:[#allocation10 + $0xd8] sm:$0xff]
    %v472 = vld [vmem:[#allocation10 + $0xe0] sm:$0xff]
    %v473 = vld [vmem:[#allocation10 + $0xe8] sm:$0xff]
    %v474 = vld [vmem:[#allocation10 + $0xf0] sm:$0xff]
    %v475 = vld [vmem:[#allocation10 + $0xf8] sm:$0xff]
    %v476 = vld [vmem:[%s11] sm:$0x3]
    %v478 = vlaneseq
    %v479 = vshrl.u32 %v478, 7
    %v480 = vsub.s32 0, %v479
    %v481 = vrot.slane %v476, %v480
    %v482 = vlaneseq
    %v483 = vshrl.u32 %v482, 7
    %v484 = vsub.s32 1, %v483
    %v485 = vrot.slane %v476, %v484
    %488 = vmatprep.subr.mxu0 %v445
    %489 = vmatpush1.msra.mxu0 %v444
    %490 = vmatprep.subr.mxu0 %v447
    %491 = vmatpush1.msra.mxu0 %v446
    %492 = vmatprep.subr.mxu0 %v449
    %493 = vmatpush1.msra.mxu0 %v448
    %494 = vmatprep.subr.mxu0 %v451
    %495 = vmatpush1.msra.mxu0 %v450
    %496 = vmatprep.subr.mxu0 %v453
    %497 = vmatpush1.msra.mxu0 %v452
    %498 = vmatprep.subr.mxu0 %v455
    %499 = vmatpush1.msra.mxu0 %v454
    %500 = vmatprep.subr.mxu0 %v457
    %501 = vmatpush1.msra.mxu0 %v456
    %502 = vmatprep.subr.mxu0 %v459
    %503 = vmatpush1.msra.mxu0 %v458
    %504 = vmatprep.subr.mxu0 %v461
    %505 = vmatpush1.msra.mxu0 %v460
    %506 = vmatprep.subr.mxu0 %v463
    %507 = vmatpush1.msra.mxu0 %v462
    %508 = vmatprep.subr.mxu0 %v465
    %509 = vmatpush1.msra.mxu0 %v464
    %510 = vmatprep.subr.mxu0 %v467
    %511 = vmatpush1.msra.mxu0 %v466
    %512 = vmatprep.subr.mxu0 %v469
    %513 = vmatpush1.msra.mxu0 %v468
    %514 = vmatprep.subr.mxu0 %v471
    %515 = vmatpush1.msra.mxu0 %v470
    %516 = vmatprep.subr.mxu0 %v473
    %517 = vmatpush1.msra.mxu0 %v472
    %518 = vmatprep.subr.mxu0 %v475
    %519 = vmatpush1.msra.mxu0 %v474
    %520 = vmatprep.subr.mxu0 0.0
    %521 = vmatpush1.msra.mxu0 0.0
    %522 = vmatprep.subr.mxu0 0.0
    %523 = vmatpush1.msra.mxu0 0.0
    %524 = vmatprep.subr.mxu0 0.0
    %525 = vmatpush1.msra.mxu0 0.0
    %526 = vmatprep.subr.mxu0 0.0
    %527 = vmatpush1.msra.mxu0 0.0
    %528 = vmatprep.subr.mxu0 0.0
    %529 = vmatpush1.msra.mxu0 0.0
    %530 = vmatprep.subr.mxu0 0.0
    %531 = vmatpush1.msra.mxu0 0.0
    %532 = vmatprep.subr.mxu0 0.0
    %533 = vmatpush1.msra.mxu0 0.0
    %534 = vmatprep.subr.mxu0 0.0
    %535 = vmatpush1.msra.mxu0 0.0
    %536 = vmatprep.subr.mxu0 0.0
    %537 = vmatpush1.msra.mxu0 0.0
    %538 = vmatprep.subr.mxu0 0.0
    %539 = vmatpush1.msra.mxu0 0.0
    %540 = vmatprep.subr.mxu0 0.0
    %541 = vmatpush1.msra.mxu0 0.0
    %542 = vmatprep.subr.mxu0 0.0
    %543 = vmatpush1.msra.mxu0 0.0
    %544 = vmatprep.subr.mxu0 0.0
    %545 = vmatpush1.msra.mxu0 0.0
    %546 = vmatprep.subr.mxu0 0.0
    %547 = vmatpush1.msra.mxu0 0.0
    %548 = vmatprep.subr.mxu0 0.0
    %549 = vmatpush1.msra.mxu0 0.0
    %550 = vmatprep.subr.mxu0 0.0
    %551 = vmatpush1.msra.mxu0 0.0
    %552 = vmatprep.mubr.f32.mxu0 0.0
    %553 = vmatmul.mubr.f32.gmra.mrb[0].mxu0 %v443
    %v554 = vpop.f32.mrb[0].mxu0
    %v555 = vadd.f32 %v481, %v554
    %v556 = vpop.f32.mrb[0].mxu0
    %v557 = vadd.f32 %v485, %v556
    %558 = vdwg.mxu0
    %v559 = vmax.f32 %v557, -10.0
    %v560 = vmin.f32 %v559, 10.0
    %v561 = vmul.f32 %v560, 0.5
    %v562 = vmul.f32 %v561, 1.442695
    %v563 = vpow.pop %v562
    %v564 = vld [vmem:[#allocation5] sm:$0xff]
    %v565 = vmul.f32 %v564, %v563
    %v566 = vadd.f32 %v555, %v565
    %v567 = vld [vmem:[#allocation11] sm:$0xff]
    %v568 = vld [vmem:[#allocation11 + $0x8] sm:$0xff]
    %v569 = vld [vmem:[#allocation11 + $0x10] sm:$0xff]
    %v570 = vld [vmem:[#allocation11 + $0x18] sm:$0xff]
    %v571 = vld [vmem:[#allocation11 + $0x20] sm:$0xff]
    %v572 = vld [vmem:[#allocation11 + $0x28] sm:$0xff]
    %v573 = vld [vmem:[#allocation11 + $0x30] sm:$0xff]
    %v574 = vld [vmem:[#allocation11 + $0x38] sm:$0xff]
    %v575 = vld [vmem:[#allocation11 + $0x40] sm:$0xff]
    %v576 = vld [vmem:[#allocation11 + $0x48] sm:$0xff]
    %v577 = vld [vmem:[#allocation11 + $0x50] sm:$0xff]
    %v578 = vld [vmem:[#allocation11 + $0x58] sm:$0xff]
    %v579 = vld [vmem:[#allocation11 + $0x60] sm:$0xff]
    %v580 = vld [vmem:[#allocation11 + $0x68] sm:$0xff]
    %v581 = vld [vmem:[#allocation11 + $0x70] sm:$0xff]
    %v582 = vld [vmem:[#allocation11 + $0x78] sm:$0xff]
    %v583 = vld [vmem:[%s13] sm:$0x1]
    %v585 = vlaneseq
    %v586 = vshrl.u32 %v585, 7
    %v587 = vsub.s32 0, %v586
    %v588 = vrot.slane %v583, %v587
    %590 = vmatprep.subr.mxu0 0.0
    %591 = vmatpush1.msra.mxu0 %v567
    %592 = vmatprep.subr.mxu0 0.0
    %593 = vmatpush1.msra.mxu0 %v568
    %594 = vmatprep.subr.mxu0 0.0
    %595 = vmatpush1.msra.mxu0 %v569
    %596 = vmatprep.subr.mxu0 0.0
    %597 = vmatpush1.msra.mxu0 %v570
    %598 = vmatprep.subr.mxu0 0.0
    %599 = vmatpush1.msra.mxu0 %v571
    %600 = vmatprep.subr.mxu0 0.0
    %601 = vmatpush1.msra.mxu0 %v572
    %602 = vmatprep.subr.mxu0 0.0
    %603 = vmatpush1.msra.mxu0 %v573
    %604 = vmatprep.subr.mxu0 0.0
    %605 = vmatpush1.msra.mxu0 %v574
    %606 = vmatprep.subr.mxu0 0.0
    %607 = vmatpush1.msra.mxu0 %v575
    %608 = vmatprep.subr.mxu0 0.0
    %609 = vmatpush1.msra.mxu0 %v576
    %610 = vmatprep.subr.mxu0 0.0
    %611 = vmatpush1.msra.mxu0 %v577
    %612 = vmatprep.subr.mxu0 0.0
    %613 = vmatpush1.msra.mxu0 %v578
    %614 = vmatprep.subr.mxu0 0.0
    %615 = vmatpush1.msra.mxu0 %v579
    %616 = vmatprep.subr.mxu0 0.0
    %617 = vmatpush1.msra.mxu0 %v580
    %618 = vmatprep.subr.mxu0 0.0
    %619 = vmatpush1.msra.mxu0 %v581
    %620 = vmatprep.subr.mxu0 0.0
    %621 = vmatpush1.msra.mxu0 %v582
    %622 = vmatprep.subr.mxu0 0.0
    %623 = vmatpush1.msra.mxu0 0.0
    %624 = vmatprep.subr.mxu0 0.0
    %625 = vmatpush1.msra.mxu0 0.0
    %626 = vmatprep.subr.mxu0 0.0
    %627 = vmatpush1.msra.mxu0 0.0
    %628 = vmatprep.subr.mxu0 0.0
    %629 = vmatpush1.msra.mxu0 0.0
    %630 = vmatprep.subr.mxu0 0.0
    %631 = vmatpush1.msra.mxu0 0.0
    %632 = vmatprep.subr.mxu0 0.0
    %633 = vmatpush1.msra.mxu0 0.0
    %634 = vmatprep.subr.mxu0 0.0
    %635 = vmatpush1.msra.mxu0 0.0
    %636 = vmatprep.subr.mxu0 0.0
    %637 = vmatpush1.msra.mxu0 0.0
    %638 = vmatprep.subr.mxu0 0.0
    %639 = vmatpush1.msra.mxu0 0.0
    %640 = vmatprep.subr.mxu0 0.0
    %641 = vmatpush1.msra.mxu0 0.0
    %642 = vmatprep.subr.mxu0 0.0
    %643 = vmatpush1.msra.mxu0 0.0
    %644 = vmatprep.subr.mxu0 0.0
    %645 = vmatpush1.msra.mxu0 0.0
    %646 = vmatprep.subr.mxu0 0.0
    %647 = vmatpush1.msra.mxu0 0.0
    %648 = vmatprep.subr.mxu0 0.0
    %649 = vmatpush1.msra.mxu0 0.0
    %650 = vmatprep.subr.mxu0 0.0
    %651 = vmatpush1.msra.mxu0 0.0
    %652 = vmatprep.subr.mxu0 0.0
    %653 = vmatpush1.msra.mxu0 0.0
    %654 = vmatprep.mubr.f32.mxu0 0.0
    %655 = vmatmul.mubr.f32.gmra.mrb[0].mxu0 %v566
    %v656 = vpop.f32.mrb[0].mxu0
    %v657 = vadd.f32 %v588, %v656
    %v658 = vpop.f32.mrb[0].mxu0
    %659 = vdwg.mxu0
    %vm660 = vcmp.ge.f32.partialorder %v657, 0.0
    %v661 = vmul.f32 %v657, 0.01
    %v662 = vsel %vm660, %v657, %v661
    %v663 = vld [vmem:[%s14] sm:$0x1]
    %v664 = vld [vmem:[%s15] sm:$0x1]
    %v665 = vrot.slane %v662, 4
    %v666 = vadd.f32 %v662, %v665
    %v667 = vrot.slane %v666, 2
    %v668 = vadd.f32 %v666, %v667
    %v669 = vrot.slane %v668, 1
    %v670 = vadd.f32 %v668, %v669
    %v671 = vmul.f32 %v670, 0.125
    %v672 = vsub.f32 %v662, %v671
    %v673 = vmul.f32 %v672, %v672
    %v674 = vrot.slane %v673, 4
    %v675 = vadd.f32 %v673, %v674
    %v676 = vrot.slane %v675, 2
    %v677 = vadd.f32 %v675, %v676
    %v678 = vrot.slane %v677, 1
    %v679 = vadd.f32 %v677, %v678
    %v680 = vmul.f32 %v679, 0.125
    %v681 = vadd.f32 %v680, 1e-05
    %v682 = vrsqrt.pop %v681
    %v683 = vmul.f32 %v672, %v682
    %v685 = vlaneseq
    %v686 = vshrl.u32 %v685, 7
    %v687 = vsub.s32 0, %v686
    %v688 = vrot.slane %v663, %v687
    %v690 = vmul.f32 %v683, %v688
    %v692 = vlaneseq
    %v693 = vshrl.u32 %v692, 7
    %v694 = vsub.s32 0, %v693
    %v695 = vrot.slane %v664, %v694
    %v697 = vadd.f32 %v690, %v695
    %v698 = vld [vmem:[#allocation13] sm:$0xff]
    %v699 = vld [vmem:[#allocation13 + $0x8] sm:$0xff]
    %v700 = vld [vmem:[#allocation13 + $0x10] sm:$0xff]
    %v701 = vld [vmem:[#allocation13 + $0x18] sm:$0xff]
    %v702 = vld [vmem:[#allocation13 + $0x20] sm:$0xff]
    %v703 = vld [vmem:[#allocation13 + $0x28] sm:$0xff]
    %v704 = vld [vmem:[#allocation13 + $0x30] sm:$0xff]
    %v705 = vld [vmem:[#allocation13 + $0x38] sm:$0xff]
    %v706 = vld [vmem:[#allocation13 + $0x40] sm:$0xff]
    %v707 = vld [vmem:[#allocation13 + $0x48] sm:$0xff]
    %v708 = vld [vmem:[#allocation13 + $0x50] sm:$0xff]
    %v709 = vld [vmem:[#allocation13 + $0x58] sm:$0xff]
    %v710 = vld [vmem:[#allocation13 + $0x60] sm:$0xff]
    %v711 = vld [vmem:[#allocation13 + $0x68] sm:$0xff]
    %v712 = vld [vmem:[#allocation13 + $0x70] sm:$0xff]
    %v713 = vld [vmem:[#allocation13 + $0x78] sm:$0xff]
    %v714 = vld [vmem:[%s17] sm:$0x1]
    %v716 = vlaneseq
    %v717 = vshrl.u32 %v716, 7
    %v718 = vsub.s32 0, %v717
    %v719 = vrot.slane %v714, %v718
    %721 = vmatprep.subr.mxu0 0.0
    %722 = vmatpush1.msra.mxu0 %v698
    %723 = vmatprep.subr.mxu0 0.0
    %724 = vmatpush1.msra.mxu0 %v699
    %725 = vmatprep.subr.mxu0 0.0
    %726 = vmatpush1.msra.mxu0 %v700
    %727 = vmatprep.subr.mxu0 0.0
    %728 = vmatpush1.msra.mxu0 %v701
    %729 = vmatprep.subr.mxu0 0.0
    %730 = vmatpush1.msra.mxu0 %v702
    %731 = vmatprep.subr.mxu0 0.0
    %732 = vmatpush1.msra.mxu0 %v703
    %733 = vmatprep.subr.mxu0 0.0
    %734 = vmatpush1.msra.mxu0 %v704
    %735 = vmatprep.subr.mxu0 0.0
    %736 = vmatpush1.msra.mxu0 %v705
    %737 = vmatprep.subr.mxu0 0.0
    %738 = vmatpush1.msra.mxu0 %v706
    %739 = vmatprep.subr.mxu0 0.0
    %740 = vmatpush1.msra.mxu0 %v707
    %741 = vmatprep.subr.mxu0 0.0
    %742 = vmatpush1.msra.mxu0 %v708
    %743 = vmatprep.subr.mxu0 0.0
    %744 = vmatpush1.msra.mxu0 %v709
    %745 = vmatprep.subr.mxu0 0.0
    %746 = vmatpush1.msra.mxu0 %v710
    %747 = vmatprep.subr.mxu0 0.0
    %748 = vmatpush1.msra.mxu0 %v711
    %749 = vmatprep.subr.mxu0 0.0
    %750 = vmatpush1.msra.mxu0 %v712
    %751 = vmatprep.subr.mxu0 0.0
    %752 = vmatpush1.msra.mxu0 %v713
    %753 = vmatprep.subr.mxu0 0.0
    %754 = vmatpush1.msra.mxu0 0.0
    %755 = vmatprep.subr.mxu0 0.0
    %756 = vmatpush1.msra.mxu0 0.0
    %757 = vmatprep.subr.mxu0 0.0
    %758 = vmatpush1.msra.mxu0 0.0
    %759 = vmatprep.subr.mxu0 0.0
    %760 = vmatpush1.msra.mxu0 0.0
    %761 = vmatprep.subr.mxu0 0.0
    %762 = vmatpush1.msra.mxu0 0.0
    %763 = vmatprep.subr.mxu0 0.0
    %764 = vmatpush1.msra.mxu0 0.0
    %765 = vmatprep.subr.mxu0 0.0
    %766 = vmatpush1.msra.mxu0 0.0
    %767 = vmatprep.subr.mxu0 0.0
    %768 = vmatpush1.msra.mxu0 0.0
    %769 = vmatprep.subr.mxu0 0.0
    %770 = vmatpush1.msra.mxu0 0.0
    %771 = vmatprep.subr.mxu0 0.0
    %772 = vmatpush1.msra.mxu0 0.0
    %773 = vmatprep.subr.mxu0 0.0
    %774 = vmatpush1.msra.mxu0 0.0
    %775 = vmatprep.subr.mxu0 0.0
    %776 = vmatpush1.msra.mxu0 0.0
    %777 = vmatprep.subr.mxu0 0.0
    %778 = vmatpush1.msra.mxu0 0.0
    %779 = vmatprep.subr.mxu0 0.0
    %780 = vmatpush1.msra.mxu0 0.0
    %781 = vmatprep.subr.mxu0 0.0
    %782 = vmatpush1.msra.mxu0 0.0
    %783 = vmatprep.subr.mxu0 0.0
    %784 = vmatpush1.msra.mxu0 0.0
    %785 = vmatprep.mubr.f32.mxu0 0.0
    %786 = vmatmul.mubr.f32.gmra.mrb[0].mxu0 %v697
    %v787 = vpop.f32.mrb[0].mxu0
    %v788 = vadd.f32 %v719, %v787
    %v789 = vpop.f32.mrb[0].mxu0
    %790 = vdwg.mxu0
    %vm791 = vcmp.ge.f32.partialorder %v788, 0.0
    %v792 = vmul.f32 %v788, 0.01
    %v793 = vsel %vm791, %v788, %v792
    %v794 = vld [vmem:[%s18] sm:$0x1]
    %v795 = vld [vmem:[%s19] sm:$0x1]
    %v796 = vrot.slane %v793, 4
    %v797 = vadd.f32 %v793, %v796
    %v798 = vrot.slane %v797, 2
    %v799 = vadd.f32 %v797, %v798
    %v800 = vrot.slane %v799, 1
    %v801 = vadd.f32 %v799, %v800
    %v802 = vmul.f32 %v801, 0.125
    %v803 = vsub.f32 %v793, %v802
    %v804 = vmul.f32 %v803, %v803
    %v805 = vrot.slane %v804, 4
    %v806 = vadd.f32 %v804, %v805
    %v807 = vrot.slane %v806, 2
    %v808 = vadd.f32 %v806, %v807
    %v809 = vrot.slane %v808, 1
    %v810 = vadd.f32 %v808, %v809
    %v811 = vmul.f32 %v810, 0.125
    %v812 = vadd.f32 %v811, 1e-05
    %v813 = vrsqrt.pop %v812
    %v814 = vmul.f32 %v803, %v813
    %v816 = vlaneseq
    %v817 = vshrl.u32 %v816, 7
    %v818 = vsub.s32 0, %v817
    %v819 = vrot.slane %v794, %v818
    %v821 = vmul.f32 %v814, %v819
    %v823 = vlaneseq
    %v824 = vshrl.u32 %v823, 7
    %v825 = vsub.s32 0, %v824
    %v826 = vrot.slane %v795, %v825
    %v828 = vadd.f32 %v821, %v826
    %v829 = vld [vmem:[#allocation14] sm:$0xff]
    %v830 = vld [vmem:[#allocation14 + $0x8] sm:$0xff]
    %v831 = vld [vmem:[#allocation14 + $0x10] sm:$0xff]
    %v832 = vld [vmem:[#allocation14 + $0x18] sm:$0xff]
    %v833 = vld [vmem:[#allocation14 + $0x20] sm:$0xff]
    %v834 = vld [vmem:[#allocation14 + $0x28] sm:$0xff]
    %v835 = vld [vmem:[#allocation14 + $0x30] sm:$0xff]
    %v836 = vld [vmem:[#allocation14 + $0x38] sm:$0xff]
    %v837 = vld [vmem:[#allocation14 + $0x40] sm:$0xff]
    %v838 = vld [vmem:[#allocation14 + $0x48] sm:$0xff]
    %v839 = vld [vmem:[#allocation14 + $0x50] sm:$0xff]
    %v840 = vld [vmem:[#allocation14 + $0x58] sm:$0xff]
    %v841 = vld [vmem:[#allocation14 + $0x60] sm:$0xff]
    %v842 = vld [vmem:[#allocation14 + $0x68] sm:$0xff]
    %v843 = vld [vmem:[#allocation14 + $0x70] sm:$0xff]
    %v844 = vld [vmem:[#allocation14 + $0x78] sm:$0xff]
    %v845 = vld [vmem:[%s21] sm:$0x1]
    %v847 = vlaneseq
    %v848 = vshrl.u32 %v847, 7
    %v849 = vsub.s32 0, %v848
    %v850 = vrot.slane %v845, %v849
    %852 = vmatprep.subr.mxu0 0.0
    %853 = vmatpush1.msra.mxu0 %v829
    %854 = vmatprep.subr.mxu0 0.0
    %855 = vmatpush1.msra.mxu0 %v830
    %856 = vmatprep.subr.mxu0 0.0
    %857 = vmatpush1.msra.mxu0 %v831
    %858 = vmatprep.subr.mxu0 0.0
    %859 = vmatpush1.msra.mxu0 %v832
    %860 = vmatprep.subr.mxu0 0.0
    %861 = vmatpush1.msra.mxu0 %v833
    %862 = vmatprep.subr.mxu0 0.0
    %863 = vmatpush1.msra.mxu0 %v834
    %864 = vmatprep.subr.mxu0 0.0
    %865 = vmatpush1.msra.mxu0 %v835
    %866 = vmatprep.subr.mxu0 0.0
    %867 = vmatpush1.msra.mxu0 %v836
    %868 = vmatprep.subr.mxu0 0.0
    %869 = vmatpush1.msra.mxu0 %v837
    %870 = vmatprep.subr.mxu0 0.0
    %871 = vmatpush1.msra.mxu0 %v838
    %872 = vmatprep.subr.mxu0 0.0
    %873 = vmatpush1.msra.mxu0 %v839
    %874 = vmatprep.subr.mxu0 0.0
    %875 = vmatpush1.msra.mxu0 %v840
    %876 = vmatprep.subr.mxu0 0.0
    %877 = vmatpush1.msra.mxu0 %v841
    %878 = vmatprep.subr.mxu0 0.0
    %879 = vmatpush1.msra.mxu0 %v842
    %880 = vmatprep.subr.mxu0 0.0
    %881 = vmatpush1.msra.mxu0 %v843
    %882 = vmatprep.subr.mxu0 0.0
    %883 = vmatpush1.msra.mxu0 %v844
    %884 = vmatprep.subr.mxu0 0.0
    %885 = vmatpush1.msra.mxu0 0.0
    %886 = vmatprep.subr.mxu0 0.0
    %887 = vmatpush1.msra.mxu0 0.0
    %888 = vmatprep.subr.mxu0 0.0
    %889 = vmatpush1.msra.mxu0 0.0
    %890 = vmatprep.subr.mxu0 0.0
    %891 = vmatpush1.msra.mxu0 0.0
    %892 = vmatprep.subr.mxu0 0.0
    %893 = vmatpush1.msra.mxu0 0.0
    %894 = vmatprep.subr.mxu0 0.0
    %895 = vmatpush1.msra.mxu0 0.0
    %896 = vmatprep.subr.mxu0 0.0
    %897 = vmatpush1.msra.mxu0 0.0
    %898 = vmatprep.subr.mxu0 0.0
    %899 = vmatpush1.msra.mxu0 0.0
    %900 = vmatprep.subr.mxu0 0.0
    %901 = vmatpush1.msra.mxu0 0.0
    %902 = vmatprep.subr.mxu0 0.0
    %903 = vmatpush1.msra.mxu0 0.0
    %904 = vmatprep.subr.mxu0 0.0
    %905 = vmatpush1.msra.mxu0 0.0
    %906 = vmatprep.subr.mxu0 0.0
    %907 = vmatpush1.msra.mxu0 0.0
    %908 = vmatprep.subr.mxu0 0.0
    %909 = vmatpush1.msra.mxu0 0.0
    %910 = vmatprep.subr.mxu0 0.0
    %911 = vmatpush1.msra.mxu0 0.0
    %912 = vmatprep.subr.mxu0 0.0
    %913 = vmatpush1.msra.mxu0 0.0
    %914 = vmatprep.subr.mxu0 0.0
    %915 = vmatpush1.msra.mxu0 0.0
    %916 = vmatprep.mubr.f32.mxu0 0.0
    %917 = vmatmul.mubr.f32.gmra.mrb[0].mxu0 %v828
    %v918 = vpop.f32.mrb[0].mxu0
    %v919 = vadd.f32 %v850, %v918
    %v920 = vpop.f32.mrb[0].mxu0
    %921 = vdwg.mxu0
    %922 = vst [vmem:[#allocation16] sm:$0xff] %v919
    %923 = vst [vmem:[#allocation17] sm:$0xff] %v555
    %924 = vst [vmem:[#allocation19] sm:$0xff] %v560
    // Predicated region
    $region122: #{tpu_custom_call.1} parent=1 // pred_check
      _
    $region123: #{tpu_custom_call.1} parent=1 // pred_check_branch
      %926 = sbr.rel (0) target = $region125
    $region124: #{tpu_custom_call.1} parent=1 // pred_region
      %s928 = ssub.s32 128, 128
      %929 = vsyncadd [#allocation4], %s928
      %s931 = sshll.u32 [#allocation16], 4
      %s932 = int_to_ptr.vmem [resolvable:$true] %s931
      %934 = dma.vmem_to_hbm [thread:$0]  %s932, 128, %s22, [#allocation4]
    $region125: #{tpu_custom_call.1} parent=1 // pred_fallthru
      _
    // Predicated region
    $region126: #{tpu_custom_call.1} parent=1 // pred_check
      _
    $region127: #{tpu_custom_call.1} parent=1 // pred_check_branch
      %936 = sbr.rel (0) target = $region129
    $region128: #{tpu_custom_call.1} parent=1 // pred_region
      %s938 = ssub.s32 128, 128
      %939 = vsyncadd [#allocation18], %s938
      %s941 = sshll.u32 [#allocation17], 4
      %s942 = int_to_ptr.vmem [resolvable:$true] %s941
      %944 = dma.vmem_to_hbm [thread:$0]  %s942, 128, %s23, [#allocation18]
    $region129: #{tpu_custom_call.1} parent=1 // pred_fallthru
      _
    // Predicated region
    $region130: #{tpu_custom_call.1} parent=1 // pred_check
      _
    $region131: #{tpu_custom_call.1} parent=1 // pred_check_branch
      %946 = sbr.rel (0) target = $region133
    $region132: #{tpu_custom_call.1} parent=1 // pred_region
      %s948 = ssub.s32 128, 128
      %949 = vsyncadd [#allocation18], %s948
      %s951 = sshll.u32 [#allocation19], 4
      %s952 = int_to_ptr.vmem [resolvable:$true] %s951
      %954 = dma.vmem_to_hbm [thread:$0]  %s952, 128, %s24, [#allocation18]
    $region133: #{tpu_custom_call.1} parent=1 // pred_fallthru
      _
    // Predicated region
    $region134: #{tpu_custom_call.1} parent=1 // pred_check
      _
    $region135: #{tpu_custom_call.1} parent=1 // pred_check_branch
      %956 = sbr.rel (0) target = $region137
    $region136: #{tpu_custom_call.1} parent=1 // pred_region
      %957 = dma.done [#allocation4], 128
    $region137: #{tpu_custom_call.1} parent=1 // pred_fallthru
      _
    // Predicated region
    $region138: #{tpu_custom_call.1} parent=1 // pred_check
      _
    $region139: #{tpu_custom_call.1} parent=1 // pred_check_branch
      %959 = sbr.rel (0) target = $region141
    $region140: #{tpu_custom_call.1} parent=1 // pred_region
      %960 = dma.done [#allocation18], 128
    $region141: #{tpu_custom_call.1} parent=1 // pred_fallthru
      _
    // Predicated region
    $region142: #{tpu_custom_call.1} parent=1 // pred_check
      _
    $region143: #{tpu_custom_call.1} parent=1 // pred_check_branch
      %962 = sbr.rel (0) target = $region145
    $region144: #{tpu_custom_call.1} parent=1 // pred_region
      %963 = dma.done [#allocation18], 128
    $region145: #{tpu_custom_call.1} parent=1 // pred_fallthru
      _
    %964 = vsyncpa [#allocation3], 1
    %965 = vsyncpa [#allocation6], 1
    %966 = vsyncpa [#allocation9], 1
    %967 = vsyncpa [#allocation12], 1
    %968 = vsyncpa [#allocation15], 1
    %969 = vsyncpa [#allocation4], 1
    %970 = vsyncpa [#allocation18], 1

</llo_original>
